<compile_context>
chip_gen: v5e
topology: v5e:2x2
jax: 0.10.0
libtpu: 0.0.40
codegen_flags: <defaults>
</compile_context>

<pallas_src>
import jax
import jax.numpy as jnp
import numpy as np
from jax.experimental import pallas as pl
from jax.experimental.pallas import tpu as pltpu

L_SSIM_W = 0.2
L_L1_W = 0.8
C1 = 0.01 ** 2
C2 = 0.03 ** 2


# ----------------------------- glue (plain JAX) -----------------------------
def gaussian_1d(window_size=11, sigma=1.5):
    x = jnp.arange(window_size, dtype=jnp.float32)
    g = jnp.exp(-((x - window_size // 2) ** 2) / (2.0 * sigma ** 2))
    return g / jnp.sum(g)


def band_matrix(n, g):
    """B[i, j] = g[i - j + half] for |i - j| <= half else 0 (zero-pad 'same' conv)."""
    ws = g.shape[0]
    half = ws // 2
    idx = jnp.arange(n)
    d = idx[:, None] - idx[None, :] + half
    valid = (d >= 0) & (d < ws)
    return jnp.where(valid, g[jnp.clip(d, 0, ws - 1)], 0.0).astype(jnp.float32)


# ------------------------------- Pallas kernel -------------------------------
def human_scene_loss_kernel(bg_ref, pred_ref, gt_ref, body_ref, mask_ref,
                            bh_ref, bw_ref,
                            gtc_ref, l1_ref, ssim_ref, msum_ref):
    C, H, W = pred_ref.shape            # static block shape
    body = body_ref[...]                # [H, W]  humanbody_mask
    m = mask_ref[...]                   # [H, W]  mask
    Bh = bh_ref[...]                    # [H, H]  banded Gaussian (rows)
    Bw = bw_ref[...]                    # [W, W]  banded Gaussian (cols)
    one_m_body = 1.0 - body

    # gt compositing per channel (static unroll over C); also emit gt_comp.
    p_list, g_list = [], []
    for c in range(C):
        p = pred_ref[c]                                   # [H, W]
        g = gt_ref[c] * body + bg_ref[c] * one_m_body     # [H, W]
        gtc_ref[c, :, :] = g
        p_list.append(p)
        g_list.append(g)

    # Channel-stacked slabs (row stacking -> sublane-aligned, cheap).
    P = jnp.concatenate(p_list, axis=0)          # [C*H, W]
    G = jnp.concatenate(g_list, axis=0)          # [C*H, W]
    M3 = jnp.concatenate([m] * C, axis=0)        # [C*H, W]

    # Masked L1 and mask sum (single reductions over all channels).
    l1_ref[0, 0] = jnp.sum(jnp.abs(P - G) * M3)
    msum_ref[0, 0] = jnp.sum(m)

    # ---------------- batched separable Gaussian conv (SSIM) ----------------
    # Row-stack the 5 operand groups (each [C*H, W]) -> [5*C*H, W].
    X = jnp.concatenate([P, G, P * P, G * G, P * G], axis=0)

    # Column (W-direction) pass: ONE big matmul, M = 5*C*H.
    T = jnp.dot(X, Bw, preferred_element_type=jnp.float32)        # [5*C*H, W]

    # Re-lay out row-stacked [n*H, W] as column-stacked [H, n*W] so the
    # row (H-direction) pass is also ONE matmul, N = 5*C*W.
    n = 5 * C
    Tc = jnp.concatenate([T[j * H:(j + 1) * H, :] for j in range(n)], axis=1)
    Y = jnp.dot(Bh, Tc, preferred_element_type=jnp.float32)       # [H, n*W]

    # Operand-group slabs, each [H, C*W] with matching channel layout, so all
    # SSIM elementwise math is lane-dense and covers every channel at once.
    CW = C * W
    mu1 = Y[:, 0 * CW:1 * CW]
    mu2 = Y[:, 1 * CW:2 * CW]
    e11 = Y[:, 2 * CW:3 * CW]
    e22 = Y[:, 3 * CW:4 * CW]
    e12 = Y[:, 4 * CW:5 * CW]

    mu1_sq = mu1 * mu1
    mu2_sq = mu2 * mu2
    mu12 = mu1 * mu2
    sigma1_sq = e11 - mu1_sq
    sigma2_sq = e22 - mu2_sq
    sigma12 = e12 - mu12

    ssim_map = ((2.0 * mu12 + C1) * (2.0 * sigma12 + C2)) / (
        (mu1_sq + mu2_sq + C1) * (sigma1_sq + sigma2_sq + C2))
    ssim_ref[0, 0] = jnp.sum(ssim_map)


def human_scene_loss(pred_img, gt_image, mask, humanbody_mask, human_bg_color):
    """render_mode='human' path of HumanSceneLoss.forward."""
    C, H, W = pred_img.shape
    g1 = gaussian_1d()
    Bh = band_matrix(H, g1)
    Bw = band_matrix(W, g1)

    vmem_spec = pl.BlockSpec(memory_space=pltpu.MemorySpace.VMEM)
    smem_spec = pl.BlockSpec(memory_space=pltpu.MemorySpace.SMEM)

    gt_comp, l1_sum, ssim_sum, m_sum = pl.pallas_call(
        human_scene_loss_kernel,
        out_shape=(
            jax.ShapeDtypeStruct((C, H, W), jnp.float32),   # composited gt
            jax.ShapeDtypeStruct((1, 1), jnp.float32),      # sum |p-g|*mask
            jax.ShapeDtypeStruct((1, 1), jnp.float32),      # sum ssim_map
            jax.ShapeDtypeStruct((1, 1), jnp.float32),      # sum mask
        ),
        in_specs=[
            smem_spec,    # human_bg_color (C,)
            vmem_spec,    # pred_img  (C,H,W)
            vmem_spec,    # gt_image  (C,H,W)
            vmem_spec,    # humanbody_mask (H,W)
            vmem_spec,    # mask (H,W)
            vmem_spec,    # Bh (H,H)
            vmem_spec,    # Bw (W,W)
        ],
        out_specs=(vmem_spec, smem_spec, smem_spec, smem_spec),
    )(human_bg_color, pred_img, gt_image, humanbody_mask, mask, Bh, Bw)

    n_elem = jnp.float32(C * H * W)
    Ll1 = l1_sum[0, 0] / n_elem                      # mean(|pred-gt| * mask)
    ssim_mean = ssim_sum[0, 0] / n_elem              # ssim(pred, gt)
    loss_ssim = (1.0 - ssim_mean) * (m_sum[0, 0] / jnp.float32(H * W))

    loss_dict = {
        "l1": L_L1_W * Ll1,
        "ssim": L_SSIM_W * loss_ssim,
    }
    loss = loss_dict["l1"] + loss_dict["ssim"]

    extras_dict = {"gt_img": gt_comp, "pred_img": pred_img}
    return loss, loss_dict, extras_dict


# ------------------------- pure-JAX reference (check) -------------------------
def reference_loss(pred_img, gt_image, mask, humanbody_mask, human_bg_color):
    C, H, W = pred_img.shape
    g1 = gaussian_1d()
    Bh = band_matrix(H, g1)
    Bw = band_matrix(W, g1)
    gt = (gt_image * humanbody_mask[None]
          + human_bg_color[:, None, None] * (1.0 - humanbody_mask[None]))

    def gconv(x):  # x: [C, H, W], zero-padded 'same' separable Gaussian
        return jnp.einsum("hk,ckl,lw->chw", Bh, x, Bw)

    mu1 = gconv(pred_img)
    mu2 = gconv(gt)
    s11 = gconv(pred_img * pred_img) - mu1 * mu1
    s22 = gconv(gt * gt) - mu2 * mu2
    s12 = gconv(pred_img * gt) - mu1 * mu2
    ssim_map = ((2 * mu1 * mu2 + C1) * (2 * s12 + C2)) / (
        (mu1 * mu1 + mu2 * mu2 + C1) * (s11 + s22 + C2))
    Ll1 = jnp.mean(jnp.abs(pred_img - gt) * mask[None])
    loss_ssim = (1.0 - jnp.mean(ssim_map)) * (jnp.sum(mask) / (H * W))
    return L_L1_W * Ll1 + L_SSIM_W * loss_ssim


# ------------------------------------ main ------------------------------------
if __name__ == "__main__":
    key = jax.random.PRNGKey(0)
    C, H, W = 3, 64, 64
    k1, k2, k3, k4 = jax.random.split(key, 4)

    gt_image = jax.random.uniform(k1, (C, H, W), jnp.float32)          # data['rgb']
    pred_img = jax.random.uniform(k2, (C, H, W), jnp.float32)          # render_pkg['render']
    mask = (jax.random.uniform(k3, (H, W)) > 0.5).astype(jnp.float32)  # data['mask']
    humanbody_mask = (jax.random.uniform(k4, (H, W)) > 0.4).astype(jnp.float32)
    human_bg_color = jnp.ones((C,), jnp.float32)                       # 'white'

    loss, loss_dict, extras = human_scene_loss(
        pred_img, gt_image, mask, humanbody_mask, human_bg_color)
    loss = jax.block_until_ready(loss)

    ref = jax.block_until_ready(
        reference_loss(pred_img, gt_image, mask, humanbody_mask, human_bg_color))
    np.testing.assert_allclose(np.asarray(loss), np.asarray(ref),
                               rtol=1e-4, atol=1e-5)

    gt_comp_ref = (gt_image * humanbody_mask[None]
                   + human_bg_color[:, None, None] * (1.0 - humanbody_mask[None]))
    np.testing.assert_allclose(np.asarray(extras["gt_img"]),
                               np.asarray(gt_comp_ref), rtol=1e-5, atol=1e-6)

    print("KERNEL_OK")
</pallas_src>

<mosaic_0001>
module attributes {stable_mosaic.version = 11 : i64} {
  func.func @human_scene_loss_kernel(%arg0: memref<3xf32, #tpu.memory_space<smem>>, %arg1: memref<3x64x64xf32, #tpu.memory_space<vmem>>, %arg2: memref<3x64x64xf32, #tpu.memory_space<vmem>>, %arg3: memref<64x64xf32, #tpu.memory_space<vmem>>, %arg4: memref<64x64xf32, #tpu.memory_space<vmem>>, %arg5: memref<64x64xf32, #tpu.memory_space<vmem>>, %arg6: memref<64x64xf32, #tpu.memory_space<vmem>>, %arg7: memref<3x64x64xf32, #tpu.memory_space<vmem>>, %arg8: memref<1x1xf32, #tpu.memory_space<smem>>, %arg9: memref<1x1xf32, #tpu.memory_space<smem>>, %arg10: memref<1x1xf32, #tpu.memory_space<smem>>) attributes {dimension_semantics = [], scalar_prefetch = 0 : i64, scratch_operands = 0 : i64, tpu.core_type = #tpu.core_type<tc>} {
    %c0 = arith.constant 0 : index
    %c0_0 = arith.constant 0 : index
    %0 = vector.load %arg3[%c0, %c0_0] : memref<64x64xf32, #tpu.memory_space<vmem>>, vector<64x64xf32>
    %c0_1 = arith.constant 0 : index
    %c0_2 = arith.constant 0 : index
    %1 = vector.load %arg4[%c0_1, %c0_2] : memref<64x64xf32, #tpu.memory_space<vmem>>, vector<64x64xf32>
    %c0_3 = arith.constant 0 : index
    %c0_4 = arith.constant 0 : index
    %2 = vector.load %arg5[%c0_3, %c0_4] : memref<64x64xf32, #tpu.memory_space<vmem>>, vector<64x64xf32>
    %c0_5 = arith.constant 0 : index
    %c0_6 = arith.constant 0 : index
    %3 = vector.load %arg6[%c0_5, %c0_6] : memref<64x64xf32, #tpu.memory_space<vmem>>, vector<64x64xf32>
    %cst = arith.constant 1.000000e+00 : f32
    %4 = vector.broadcast %cst : f32 to vector<64x64xf32>
    %5 = arith.subf %4, %0 : vector<64x64xf32>
    %c0_7 = arith.constant 0 : index
    %c0_8 = arith.constant 0 : index
    %c0_9 = arith.constant 0 : index
    %6 = vector.load %arg1[%c0_7, %c0_8, %c0_9] : memref<3x64x64xf32, #tpu.memory_space<vmem>>, vector<1x64x64xf32>
    %7 = vector.shape_cast %6 : vector<1x64x64xf32> to vector<64x64xf32>
    %c0_10 = arith.constant 0 : index
    %c0_11 = arith.constant 0 : index
    %c0_12 = arith.constant 0 : index
    %8 = vector.load %arg2[%c0_10, %c0_11, %c0_12] : memref<3x64x64xf32, #tpu.memory_space<vmem>>, vector<1x64x64xf32>
    %9 = vector.shape_cast %8 : vector<1x64x64xf32> to vector<64x64xf32>
    %10 = arith.mulf %9, %0 : vector<64x64xf32>
    %c0_13 = arith.constant 0 : index
    %11 = memref.load %arg0[%c0_13] : memref<3xf32, #tpu.memory_space<smem>>
    %12 = vector.broadcast %11 : f32 to vector<64x64xf32>
    %13 = arith.mulf %12, %5 : vector<64x64xf32>
    %14 = arith.addf %10, %13 : vector<64x64xf32>
    %c0_14 = arith.constant 0 : index
    %c0_15 = arith.constant 0 : index
    %c0_16 = arith.constant 0 : index
    %15 = vector.load %arg7[%c0_14, %c0_15, %c0_16] : memref<3x64x64xf32, #tpu.memory_space<vmem>>, vector<1x64x64xf32>
    %16 = vector.shape_cast %15 : vector<1x64x64xf32> to vector<64x64xf32>
    %17 = vector.shape_cast %14 : vector<64x64xf32> to vector<1x64x64xf32>
    tpu.vector_store %arg7[%c0_14, %c0_15, %c0_16], %17 {strides = array<i32>} : memref<3x64x64xf32, #tpu.memory_space<vmem>>, vector<1x64x64xf32>,
    %c1 = arith.constant 1 : index
    %c0_17 = arith.constant 0 : index
    %c0_18 = arith.constant 0 : index
    %18 = vector.load %arg1[%c1, %c0_17, %c0_18] : memref<3x64x64xf32, #tpu.memory_space<vmem>>, vector<1x64x64xf32>
    %19 = vector.shape_cast %18 : vector<1x64x64xf32> to vector<64x64xf32>
    %c1_19 = arith.constant 1 : index
    %c0_20 = arith.constant 0 : index
    %c0_21 = arith.constant 0 : index
    %20 = vector.load %arg2[%c1_19, %c0_20, %c0_21] : memref<3x64x64xf32, #tpu.memory_space<vmem>>, vector<1x64x64xf32>
    %21 = vector.shape_cast %20 : vector<1x64x64xf32> to vector<64x64xf32>
    %22 = arith.mulf %21, %0 : vector<64x64xf32>
    %c1_22 = arith.constant 1 : index
    %23 = memref.load %arg0[%c1_22] : memref<3xf32, #tpu.memory_space<smem>>
    %24 = vector.broadcast %23 : f32 to vector<64x64xf32>
    %25 = arith.mulf %24, %5 : vector<64x64xf32>
    %26 = arith.addf %22, %25 : vector<64x64xf32>
    %c1_23 = arith.constant 1 : index
    %c0_24 = arith.constant 0 : index
    %c0_25 = arith.constant 0 : index
    %27 = vector.load %arg7[%c1_23, %c0_24, %c0_25] : memref<3x64x64xf32, #tpu.memory_space<vmem>>, vector<1x64x64xf32>
    %28 = vector.shape_cast %27 : vector<1x64x64xf32> to vector<64x64xf32>
    %29 = vector.shape_cast %26 : vector<64x64xf32> to vector<1x64x64xf32>
    tpu.vector_store %arg7[%c1_23, %c0_24, %c0_25], %29 {strides = array<i32>} : memref<3x64x64xf32, #tpu.memory_space<vmem>>, vector<1x64x64xf32>,
    %c2 = arith.constant 2 : index
    %c0_26 = arith.constant 0 : index
    %c0_27 = arith.constant 0 : index
    %30 = vector.load %arg1[%c2, %c0_26, %c0_27] : memref<3x64x64xf32, #tpu.memory_space<vmem>>, vector<1x64x64xf32>
    %31 = vector.shape_cast %30 : vector<1x64x64xf32> to vector<64x64xf32>
    %c2_28 = arith.constant 2 : index
    %c0_29 = arith.constant 0 : index
    %c0_30 = arith.constant 0 : index
    %32 = vector.load %arg2[%c2_28, %c0_29, %c0_30] : memref<3x64x64xf32, #tpu.memory_space<vmem>>, vector<1x64x64xf32>
    %33 = vector.shape_cast %32 : vector<1x64x64xf32> to vector<64x64xf32>
    %34 = arith.mulf %33, %0 : vector<64x64xf32>
    %c2_31 = arith.constant 2 : index
    %35 = memref.load %arg0[%c2_31] : memref<3xf32, #tpu.memory_space<smem>>
    %36 = vector.broadcast %35 : f32 to vector<64x64xf32>
    %37 = arith.mulf %36, %5 : vector<64x64xf32>
    %38 = arith.addf %34, %37 : vector<64x64xf32>
    %c2_32 = arith.constant 2 : index
    %c0_33 = arith.constant 0 : index
    %c0_34 = arith.constant 0 : index
    %39 = vector.load %arg7[%c2_32, %c0_33, %c0_34] : memref<3x64x64xf32, #tpu.memory_space<vmem>>, vector<1x64x64xf32>
    %40 = vector.shape_cast %39 : vector<1x64x64xf32> to vector<64x64xf32>
    %41 = vector.shape_cast %38 : vector<64x64xf32> to vector<1x64x64xf32>
    tpu.vector_store %arg7[%c2_32, %c0_33, %c0_34], %41 {strides = array<i32>} : memref<3x64x64xf32, #tpu.memory_space<vmem>>, vector<1x64x64xf32>,
    %42 = tpu.concatenate %7, %19, %31 in 0 : vector<64x64xf32>, vector<64x64xf32>, vector<64x64xf32> -> vector<192x64xf32>
    %43 = tpu.concatenate %14, %26, %38 in 0 : vector<64x64xf32>, vector<64x64xf32>, vector<64x64xf32> -> vector<192x64xf32>
    %44 = tpu.concatenate %1, %1, %1 in 0 : vector<64x64xf32>, vector<64x64xf32>, vector<64x64xf32> -> vector<192x64xf32>
    %45 = arith.subf %42, %43 : vector<192x64xf32>
    %46 = math.absf %45 : vector<192x64xf32>
    %47 = arith.mulf %46, %44 : vector<192x64xf32>
    %48 = vector.shape_cast %47 : vector<192x64xf32> to vector<1x192x64xf32>
    %cst_35 = arith.constant dense<0.000000e+00> : vector<1xf32>
    %49 = vector.multi_reduction <add>, %48, %cst_35 [1, 2] : vector<1x192x64xf32> to vector<1xf32>
    %50 = vector.shape_cast %49 : vector<1xf32> to vector<1x1x1xf32>
    %51 = vector.extract %50[0, 0, 0] : f32 from vector<1x1x1xf32>
    %c0_36 = arith.constant 0 : index
    %c0_37 = arith.constant 0 : index
    %52 = memref.load %arg8[%c0_36, %c0_37] : memref<1x1xf32, #tpu.memory_space<smem>>
    memref.store %51, %arg8[%c0_36, %c0_37] : memref<1x1xf32, #tpu.memory_space<smem>>
    %53 = vector.shape_cast %1 : vector<64x64xf32> to vector<1x64x64xf32>
    %cst_38 = arith.constant dense<0.000000e+00> : vector<1xf32>
    %54 = vector.multi_reduction <add>, %53, %cst_38 [1, 2] : vector<1x64x64xf32> to vector<1xf32>
    %55 = vector.shape_cast %54 : vector<1xf32> to vector<1x1x1xf32>
    %56 = vector.extract %55[0, 0, 0] : f32 from vector<1x1x1xf32>
    %c0_39 = arith.constant 0 : index
    %c0_40 = arith.constant 0 : index
    %57 = memref.load %arg10[%c0_39, %c0_40] : memref<1x1xf32, #tpu.memory_space<smem>>
    memref.store %56, %arg10[%c0_39, %c0_40] : memref<1x1xf32, #tpu.memory_space<smem>>
    %58 = arith.mulf %42, %42 : vector<192x64xf32>
    %59 = arith.mulf %43, %43 : vector<192x64xf32>
    %60 = arith.mulf %42, %43 : vector<192x64xf32>
    %61 = tpu.concatenate %42, %43, %58, %59, %60 in 0 : vector<192x64xf32>, vector<192x64xf32>, vector<192x64xf32>, vector<192x64xf32>, vector<192x64xf32> -> vector<960x64xf32>
    %cst_41 = arith.constant dense<0.000000e+00> : vector<960x64xf32>
    %62 = tpu.matmul %61, %3, %cst_41 {dimension_numbers = #tpu.dot_dimension_numbers<[1], [0], [0], [1], [0, 0, 1, 1], [], []>} : vector<960x64xf32>, vector<64x64xf32>, vector<960x64xf32> -> vector<960x64xf32>
    %63 = vector.extract_strided_slice %62 {offsets = [0, 0], sizes = [64, 64], strides = [1, 1]} : vector<960x64xf32> to vector<64x64xf32>
    %64 = vector.extract_strided_slice %62 {offsets = [64, 0], sizes = [64, 64], strides = [1, 1]} : vector<960x64xf32> to vector<64x64xf32>
    %65 = vector.extract_strided_slice %62 {offsets = [128, 0], sizes = [64, 64], strides = [1, 1]} : vector<960x64xf32> to vector<64x64xf32>
    %66 = vector.extract_strided_slice %62 {offsets = [192, 0], sizes = [64, 64], strides = [1, 1]} : vector<960x64xf32> to vector<64x64xf32>
    %67 = vector.extract_strided_slice %62 {offsets = [256, 0], sizes = [64, 64], strides = [1, 1]} : vector<960x64xf32> to vector<64x64xf32>
    %68 = vector.extract_strided_slice %62 {offsets = [320, 0], sizes = [64, 64], strides = [1, 1]} : vector<960x64xf32> to vector<64x64xf32>
    %69 = vector.extract_strided_slice %62 {offsets = [384, 0], sizes = [64, 64], strides = [1, 1]} : vector<960x64xf32> to vector<64x64xf32>
    %70 = vector.extract_strided_slice %62 {offsets = [448, 0], sizes = [64, 64], strides = [1, 1]} : vector<960x64xf32> to vector<64x64xf32>
    %71 = vector.extract_strided_slice %62 {offsets = [512, 0], sizes = [64, 64], strides = [1, 1]} : vector<960x64xf32> to vector<64x64xf32>
    %72 = vector.extract_strided_slice %62 {offsets = [576, 0], sizes = [64, 64], strides = [1, 1]} : vector<960x64xf32> to vector<64x64xf32>
    %73 = vector.extract_strided_slice %62 {offsets = [640, 0], sizes = [64, 64], strides = [1, 1]} : vector<960x64xf32> to vector<64x64xf32>
    %74 = vector.extract_strided_slice %62 {offsets = [704, 0], sizes = [64, 64], strides = [1, 1]} : vector<960x64xf32> to vector<64x64xf32>
    %75 = vector.extract_strided_slice %62 {offsets = [768, 0], sizes = [64, 64], strides = [1, 1]} : vector<960x64xf32> to vector<64x64xf32>
    %76 = vector.extract_strided_slice %62 {offsets = [832, 0], sizes = [64, 64], strides = [1, 1]} : vector<960x64xf32> to vector<64x64xf32>
    %77 = vector.extract_strided_slice %62 {offsets = [896, 0], sizes = [64, 64], strides = [1, 1]} : vector<960x64xf32> to vector<64x64xf32>
    %78 = tpu.concatenate %63, %64, %65, %66, %67, %68, %69, %70, %71, %72, %73, %74, %75, %76, %77 in 1 : vector<64x64xf32>, vector<64x64xf32>, vector<64x64xf32>, vector<64x64xf32>, vector<64x64xf32>, vector<64x64xf32>, vector<64x64xf32>, vector<64x64xf32>, vector<64x64xf32>, vector<64x64xf32>, vector<64x64xf32>, vector<64x64xf32>, vector<64x64xf32>, vector<64x64xf32>, vector<64x64xf32> -> vector<64x960xf32>
    %cst_42 = arith.constant dense<0.000000e+00> : vector<64x960xf32>
    %79 = tpu.matmul %2, %78, %cst_42 {dimension_numbers = #tpu.dot_dimension_numbers<[1], [0], [0], [1], [0, 0, 1, 1], [], []>} : vector<64x64xf32>, vector<64x960xf32>, vector<64x960xf32> -> vector<64x960xf32>
    %80 = vector.extract_strided_slice %79 {offsets = [0, 0], sizes = [64, 192], strides = [1, 1]} : vector<64x960xf32> to vector<64x192xf32>
    %81 = vector.extract_strided_slice %79 {offsets = [0, 192], sizes = [64, 192], strides = [1, 1]} : vector<64x960xf32> to vector<64x192xf32>
    %82 = vector.extract_strided_slice %79 {offsets = [0, 384], sizes = [64, 192], strides = [1, 1]} : vector<64x960xf32> to vector<64x192xf32>
    %83 = vector.extract_strided_slice %79 {offsets = [0, 576], sizes = [64, 192], strides = [1, 1]} : vector<64x960xf32> to vector<64x192xf32>
    %84 = vector.extract_strided_slice %79 {offsets = [0, 768], sizes = [64, 192], strides = [1, 1]} : vector<64x960xf32> to vector<64x192xf32>
    %85 = arith.mulf %80, %80 : vector<64x192xf32>
    %86 = arith.mulf %81, %81 : vector<64x192xf32>
    %87 = arith.mulf %80, %81 : vector<64x192xf32>
    %88 = arith.subf %82, %85 : vector<64x192xf32>
    %89 = arith.subf %83, %86 : vector<64x192xf32>
    %90 = arith.subf %84, %87 : vector<64x192xf32>
    %cst_43 = arith.constant 2.000000e+00 : f32
    %91 = vector.broadcast %cst_43 : f32 to vector<64x192xf32>
    %92 = arith.mulf %91, %87 : vector<64x192xf32>
    %cst_44 = arith.constant 9.99999974E-5 : f32
    %93 = vector.broadcast %cst_44 : f32 to vector<64x192xf32>
    %94 = arith.addf %92, %93 : vector<64x192xf32>
    %cst_45 = arith.constant 2.000000e+00 : f32
    %95 = vector.broadcast %cst_45 : f32 to vector<64x192xf32>
    %96 = arith.mulf %95, %90 : vector<64x192xf32>
    %cst_46 = arith.constant 8.99999984E-4 : f32
    %97 = vector.broadcast %cst_46 : f32 to vector<64x192xf32>
    %98 = arith.addf %96, %97 : vector<64x192xf32>
    %99 = arith.mulf %94, %98 : vector<64x192xf32>
    %100 = arith.addf %85, %86 : vector<64x192xf32>
    %cst_47 = arith.constant 9.99999974E-5 : f32
    %101 = vector.broadcast %cst_47 : f32 to vector<64x192xf32>
    %102 = arith.addf %100, %101 : vector<64x192xf32>
    %103 = arith.addf %88, %89 : vector<64x192xf32>
    %cst_48 = arith.constant 8.99999984E-4 : f32
    %104 = vector.broadcast %cst_48 : f32 to vector<64x192xf32>
    %105 = arith.addf %103, %104 : vector<64x192xf32>
    %106 = arith.mulf %102, %105 : vector<64x192xf32>
    %107 = arith.divf %99, %106 : vector<64x192xf32>
    %108 = vector.shape_cast %107 : vector<64x192xf32> to vector<1x64x192xf32>
    %cst_49 = arith.constant dense<0.000000e+00> : vector<1xf32>
    %109 = vector.multi_reduction <add>, %108, %cst_49 [1, 2] : vector<1x64x192xf32> to vector<1xf32>
    %110 = vector.shape_cast %109 : vector<1xf32> to vector<1x1x1xf32>
    %111 = vector.extract %110[0, 0, 0] : f32 from vector<1x1x1xf32>
    %c0_50 = arith.constant 0 : index
    %c0_51 = arith.constant 0 : index
    %112 = memref.load %arg9[%c0_50, %c0_51] : memref<1x1xf32, #tpu.memory_space<smem>>
    memref.store %111, %arg9[%c0_50, %c0_51] : memref<1x1xf32, #tpu.memory_space<smem>>
    return
  }
}

</mosaic_0001>

<llo_original>
// kernel: tpu_custom_call.1
$region0: #{tpu_custom_call.1}
  #allocation0 [shape = 'u32[]', space=smem, size = 0x4, offset = 0x4, fixed_abs, tag = 'smem constant byte address 0x4 - core index']
  #allocation1 [shape = 'u32[72,128]{1,0:T(1,128)}', space=vmem, size = 0x9000, scoped, tag = 'internal scratch']
  %s0 = inlined_call_operand.hbm [shape: f32[3], index: 0, kind: input, shape index: {}]
  %s1 = inlined_call_operand.hbm [shape: f32[3,64,64], index: 1, kind: input, shape index: {}]
  %s2 = inlined_call_operand.hbm [shape: f32[3,64,64], index: 2, kind: input, shape index: {}]
  %s3 = inlined_call_operand.hbm [shape: f32[64,64], index: 3, kind: input, shape index: {}]
  %s4 = inlined_call_operand.hbm [shape: f32[64,64], index: 4, kind: input, shape index: {}]
  %s5 = inlined_call_operand.hbm [shape: f32[64,64], index: 5, kind: input, shape index: {}]
  %s6 = inlined_call_operand.hbm [shape: f32[64,64], index: 6, kind: input, shape index: {}]
  %s7 = inlined_call_operand.hbm [shape: f32[3,64,64], index: 7, kind: output, shape index: {0}]
  %s8 = inlined_call_operand.hbm [shape: f32[1,1], index: 8, kind: output, shape index: {1}]
  %s9 = inlined_call_operand.hbm [shape: f32[1,1], index: 9, kind: output, shape index: {2}]
  %s10 = inlined_call_operand.hbm [shape: f32[1,1], index: 10, kind: output, shape index: {3}]
  %11 = xla_tuple %s7, %s8, %s9, %s10
  %s12 = sld [smem:[#allocation0]]
  $region90: #{tpu_custom_call.1} parent=0
    _
  %s14 = ssub.s32 1, %s12
  %s15 = scalar_select 0, %s14, %s12
  $region1: #{tpu_custom_call.1} parent=0
    #allocation2 [shape = 'u8[512]{0}', space=smem, size = 0x200, scoped, tag = 'input window, operand 0, single buffered']
    #allocation3 [shape = 's32[1]{0}', space=sflag, size = 0x4, scoped, tag = 'scoped memory for tpu_custom_call.1']
    #allocation4 [shape = 's32[1]{0}', space=sflag, size = 0x4, scoped, tag = 'scoped memory for tpu_custom_call.1']
    #allocation5 [shape = 's32[1]{0}', space=sflag, size = 0x4, scoped, tag = 'scoped memory for tpu_custom_call.1']
    #allocation6 [shape = 's32[1]{0}', space=sflag, size = 0x4, scoped, tag = 'scoped memory for tpu_custom_call.1']
    #allocation7 [shape = 'u8[98304]{0}', space=vmem, size = 0x18000, scoped, tag = 'input window, operand 1, single buffered']
    #allocation8 [shape = 'u8[98304]{0}', space=vmem, size = 0x18000, scoped, tag = 'input window, operand 2, single buffered']
    #allocation9 [shape = 's32[1]{0}', space=sflag, size = 0x4, scoped, tag = 'scoped memory for tpu_custom_call.1']
    #allocation10 [shape = 'u8[32768]{0}', space=vmem, size = 0x8000, scoped, tag = 'input window, operand 3, single buffered']
    #allocation11 [shape = 'u8[32768]{0}', space=vmem, size = 0x8000, scoped, tag = 'input window, operand 4, single buffered']
    #allocation12 [shape = 's32[1]{0}', space=sflag, size = 0x4, scoped, tag = 'scoped memory for tpu_custom_call.1']
    #allocation13 [shape = 'u8[32768]{0}', space=vmem, size = 0x8000, scoped, tag = 'input window, operand 5, single buffered']
    #allocation14 [shape = 'u8[32768]{0}', space=vmem, size = 0x8000, scoped, tag = 'input window, operand 6, single buffered']
    #allocation15 [shape = 's32[1]{0}', space=sflag, size = 0x4, scoped, tag = 'scoped memory for tpu_custom_call.1']
    #allocation16 [shape = 'u8[98304]{0}', space=vmem, size = 0x18000, scoped, tag = 'output window, operand 0, single buffered']
    #allocation17 [shape = 'u8[512]{0}', space=smem, size = 0x200, scoped, tag = 'output window, operand 1, single buffered']
    #allocation18 [shape = 'u8[512]{0}', space=smem, size = 0x200, scoped, tag = 'output window, operand 2, single buffered']
    #allocation19 [shape = 's32[1]{0}', space=sflag, size = 0x4, scoped, tag = 'scoped memory for tpu_custom_call.1']
    #allocation20 [shape = 'u8[512]{0}', space=smem, size = 0x200, scoped, tag = 'output window, operand 3, single buffered']
    %16 = vsyncpa [#allocation5], 0
    %17 = vsyncpa [#allocation3], 0
    %18 = vsyncpa [#allocation9], 0
    %19 = vsyncpa [#allocation12], 0
    %20 = vsyncpa [#allocation15], 0
    %21 = vsyncpa [#allocation4], 0
    %22 = vsyncpa [#allocation6], 0
    %23 = vsyncpa [#allocation19], 0
    // Predicated region
    $region2: #{tpu_custom_call.1} parent=1 // pred_check
      _
    $region3: #{tpu_custom_call.1} parent=1 // pred_check_branch
      %25 = sbr.rel (0) target = $region5
    $region4: #{tpu_custom_call.1} parent=1 // pred_region
      %27 = vsyncadd [#allocation5], 0
      %s29 = sshll.u32 %s0, 4
      %s30 = int_to_ptr.hbm [resolvable:$true] %s29
      %32 = dma.hbm_to_smem %s30, 16, [#allocation2], [#allocation5]
    $region5: #{tpu_custom_call.1} parent=1 // pred_fallthru
      _
    // Predicated region
    $region6: #{tpu_custom_call.1} parent=1 // pred_check
      _
    $region7: #{tpu_custom_call.1} parent=1 // pred_check_branch
      %34 = sbr.rel (0) target = $region9
    $region8: #{tpu_custom_call.1} parent=1 // pred_region
      %36 = vsyncadd [#allocation3], 0
      %s37 = sshll.u32 %s1, 4
      %s38 = int_to_ptr.hbm [resolvable:$true] %s37
      %s39 = sshll.u32 [#allocation7], 4
      %s40 = int_to_ptr.vmem [resolvable:$true] %s39
      %45 = dma.hbm_to_vmem [thread:$0]  %s38, 3072, %s40, [#allocation3], 128, 128, 8
    $region9: #{tpu_custom_call.1} parent=1 // pred_fallthru
      _
    // Predicated region
    $region10: #{tpu_custom_call.1} parent=1 // pred_check
      _
    $region11: #{tpu_custom_call.1} parent=1 // pred_check_branch
      %47 = sbr.rel (0) target = $region13
    $region12: #{tpu_custom_call.1} parent=1 // pred_region
      %49 = vsyncadd [#allocation9], 0
      %s50 = sshll.u32 %s2, 4
      %s51 = int_to_ptr.hbm [resolvable:$true] %s50
      %s52 = sshll.u32 [#allocation8], 4
      %s53 = int_to_ptr.vmem [resolvable:$true] %s52
      %58 = dma.hbm_to_vmem [thread:$0]  %s51, 3072, %s53, [#allocation9], 128, 128, 8
    $region13: #{tpu_custom_call.1} parent=1 // pred_fallthru
      _
    // Predicated region
    $region14: #{tpu_custom_call.1} parent=1 // pred_check
      _
    $region15: #{tpu_custom_call.1} parent=1 // pred_check_branch
      %60 = sbr.rel (0) target = $region17
    $region16: #{tpu_custom_call.1} parent=1 // pred_region
      %62 = vsyncadd [#allocation9], 0
      %s63 = sshll.u32 %s3, 4
      %s64 = int_to_ptr.hbm [resolvable:$true] %s63
      %s65 = sshll.u32 [#allocation10], 4
      %s66 = int_to_ptr.vmem [resolvable:$true] %s65
      %71 = dma.hbm_to_vmem [thread:$0]  %s64, 1024, %s66, [#allocation9], 128, 128, 8
    $region17: #{tpu_custom_call.1} parent=1 // pred_fallthru
      _
    // Predicated region
    $region18: #{tpu_custom_call.1} parent=1 // pred_check
      _
    $region19: #{tpu_custom_call.1} parent=1 // pred_check_branch
      %73 = sbr.rel (0) target = $region21
    $region20: #{tpu_custom_call.1} parent=1 // pred_region
      %75 = vsyncadd [#allocation12], 0
      %s76 = sshll.u32 %s4, 4
      %s77 = int_to_ptr.hbm [resolvable:$true] %s76
      %s78 = sshll.u32 [#allocation11], 4
      %s79 = int_to_ptr.vmem [resolvable:$true] %s78
      %84 = dma.hbm_to_vmem [thread:$0]  %s77, 1024, %s79, [#allocation12], 128, 128, 8
    $region21: #{tpu_custom_call.1} parent=1 // pred_fallthru
      _
    // Predicated region
    $region22: #{tpu_custom_call.1} parent=1 // pred_check
      _
    $region23: #{tpu_custom_call.1} parent=1 // pred_check_branch
      %86 = sbr.rel (0) target = $region25
    $region24: #{tpu_custom_call.1} parent=1 // pred_region
      %88 = vsyncadd [#allocation12], 0
      %s89 = sshll.u32 %s5, 4
      %s90 = int_to_ptr.hbm [resolvable:$true] %s89
      %s91 = sshll.u32 [#allocation13], 4
      %s92 = int_to_ptr.vmem [resolvable:$true] %s91
      %97 = dma.hbm_to_vmem [thread:$0]  %s90, 1024, %s92, [#allocation12], 128, 128, 8
    $region25: #{tpu_custom_call.1} parent=1 // pred_fallthru
      _
    // Predicated region
    $region26: #{tpu_custom_call.1} parent=1 // pred_check
      _
    $region27: #{tpu_custom_call.1} parent=1 // pred_check_branch
      %99 = sbr.rel (0) target = $region29
    $region28: #{tpu_custom_call.1} parent=1 // pred_region
      %101 = vsyncadd [#allocation15], 0
      %s102 = sshll.u32 %s6, 4
      %s103 = int_to_ptr.hbm [resolvable:$true] %s102
      %s104 = sshll.u32 [#allocation14], 4
      %s105 = int_to_ptr.vmem [resolvable:$true] %s104
      %110 = dma.hbm_to_vmem [thread:$0]  %s103, 1024, %s105, [#allocation15], 128, 128, 8
    $region29: #{tpu_custom_call.1} parent=1 // pred_fallthru
      _
    // Predicated region
    $region30: #{tpu_custom_call.1} parent=1 // pred_check
      _
    $region31: #{tpu_custom_call.1} parent=1 // pred_check_branch
      %112 = sbr.rel (0) target = $region33
    $region32: #{tpu_custom_call.1} parent=1 // pred_region
      %114 = dma.done [#allocation5], 16
    $region33: #{tpu_custom_call.1} parent=1 // pred_fallthru
      _
    // Predicated region
    $region34: #{tpu_custom_call.1} parent=1 // pred_check
      _
    $region35: #{tpu_custom_call.1} parent=1 // pred_check_branch
      %116 = sbr.rel (0) target = $region37
    $region36: #{tpu_custom_call.1} parent=1 // pred_region
      %118 = dma.done [#allocation3], 3072
    $region37: #{tpu_custom_call.1} parent=1 // pred_fallthru
      _
    // Predicated region
    $region38: #{tpu_custom_call.1} parent=1 // pred_check
      _
    $region39: #{tpu_custom_call.1} parent=1 // pred_check_branch
      %120 = sbr.rel (0) target = $region41
    $region40: #{tpu_custom_call.1} parent=1 // pred_region
      %122 = dma.done [#allocation9], 3072
    $region41: #{tpu_custom_call.1} parent=1 // pred_fallthru
      _
    // Predicated region
    $region42: #{tpu_custom_call.1} parent=1 // pred_check
      _
    $region43: #{tpu_custom_call.1} parent=1 // pred_check_branch
      %124 = sbr.rel (0) target = $region45
    $region44: #{tpu_custom_call.1} parent=1 // pred_region
      %126 = dma.done [#allocation9], 1024
    $region45: #{tpu_custom_call.1} parent=1 // pred_fallthru
      _
    // Predicated region
    $region46: #{tpu_custom_call.1} parent=1 // pred_check
      _
    $region47: #{tpu_custom_call.1} parent=1 // pred_check_branch
      %128 = sbr.rel (0) target = $region49
    $region48: #{tpu_custom_call.1} parent=1 // pred_region
      %130 = dma.done [#allocation12], 1024
    $region49: #{tpu_custom_call.1} parent=1 // pred_fallthru
      _
    // Predicated region
    $region50: #{tpu_custom_call.1} parent=1 // pred_check
      _
    $region51: #{tpu_custom_call.1} parent=1 // pred_check_branch
      %132 = sbr.rel (0) target = $region53
    $region52: #{tpu_custom_call.1} parent=1 // pred_region
      %134 = dma.done [#allocation12], 1024
    $region53: #{tpu_custom_call.1} parent=1 // pred_fallthru
      _
    // Predicated region
    $region54: #{tpu_custom_call.1} parent=1 // pred_check
      _
    $region55: #{tpu_custom_call.1} parent=1 // pred_check_branch
      %136 = sbr.rel (0) target = $region57
    $region56: #{tpu_custom_call.1} parent=1 // pred_region
      %138 = dma.done [#allocation15], 1024
    $region57: #{tpu_custom_call.1} parent=1 // pred_fallthru
      _
    %139 = sfence
    %v140 = vld [vmem:[#allocation10] sm:$0xff]
    %v141 = vld [vmem:[#allocation10 + $0x8] sm:$0xff]
    %v142 = vld [vmem:[#allocation10 + $0x10] sm:$0xff]
    %v143 = vld [vmem:[#allocation10 + $0x18] sm:$0xff]
    %v144 = vld [vmem:[#allocation10 + $0x20] sm:$0xff]
    %v145 = vld [vmem:[#allocation10 + $0x28] sm:$0xff]
    %v146 = vld [vmem:[#allocation10 + $0x30] sm:$0xff]
    %v147 = vld [vmem:[#allocation10 + $0x38] sm:$0xff]
    %v148 = vld [vmem:[#allocation11] sm:$0xff]
    %v149 = vld [vmem:[#allocation11 + $0x8] sm:$0xff]
    %v150 = vld [vmem:[#allocation11 + $0x10] sm:$0xff]
    %v151 = vld [vmem:[#allocation11 + $0x18] sm:$0xff]
    %v152 = vld [vmem:[#allocation11 + $0x20] sm:$0xff]
    %v153 = vld [vmem:[#allocation11 + $0x28] sm:$0xff]
    %v154 = vld [vmem:[#allocation11 + $0x30] sm:$0xff]
    %v155 = vld [vmem:[#allocation11 + $0x38] sm:$0xff]
    %v156 = vld [vmem:[#allocation13] sm:$0xff]
    %v157 = vld [vmem:[#allocation13 + $0x8] sm:$0xff]
    %v158 = vld [vmem:[#allocation13 + $0x10] sm:$0xff]
    %v159 = vld [vmem:[#allocation13 + $0x18] sm:$0xff]
    %v160 = vld [vmem:[#allocation13 + $0x20] sm:$0xff]
    %v161 = vld [vmem:[#allocation13 + $0x28] sm:$0xff]
    %v162 = vld [vmem:[#allocation13 + $0x30] sm:$0xff]
    %v163 = vld [vmem:[#allocation13 + $0x38] sm:$0xff]
    %v164 = vld [vmem:[#allocation14] sm:$0xff]
    %v165 = vld [vmem:[#allocation14 + $0x8] sm:$0xff]
    %v166 = vld [vmem:[#allocation14 + $0x10] sm:$0xff]
    %v167 = vld [vmem:[#allocation14 + $0x18] sm:$0xff]
    %v168 = vld [vmem:[#allocation14 + $0x20] sm:$0xff]
    %v169 = vld [vmem:[#allocation14 + $0x28] sm:$0xff]
    %v170 = vld [vmem:[#allocation14 + $0x30] sm:$0xff]
    %v171 = vld [vmem:[#allocation14 + $0x38] sm:$0xff]
    %v172 = vsub.f32 1.0, %v140
    %v173 = vsub.f32 1.0, %v141
    %v174 = vsub.f32 1.0, %v142
    %v175 = vsub.f32 1.0, %v143
    %v176 = vsub.f32 1.0, %v144
    %v177 = vsub.f32 1.0, %v145
    %v178 = vsub.f32 1.0, %v146
    %v179 = vsub.f32 1.0, %v147
    %v180 = vld [vmem:[#allocation7] sm:$0xff]
    %v181 = vld [vmem:[#allocation7 + $0x8] sm:$0xff]
    %v182 = vld [vmem:[#allocation7 + $0x10] sm:$0xff]
    %v183 = vld [vmem:[#allocation7 + $0x18] sm:$0xff]
    %v184 = vld [vmem:[#allocation7 + $0x20] sm:$0xff]
    %v185 = vld [vmem:[#allocation7 + $0x28] sm:$0xff]
    %v186 = vld [vmem:[#allocation7 + $0x30] sm:$0xff]
    %v187 = vld [vmem:[#allocation7 + $0x38] sm:$0xff]
    %v188 = vld [vmem:[#allocation8] sm:$0xff]
    %v189 = vld [vmem:[#allocation8 + $0x8] sm:$0xff]
    %v190 = vld [vmem:[#allocation8 + $0x10] sm:$0xff]
    %v191 = vld [vmem:[#allocation8 + $0x18] sm:$0xff]
    %v192 = vld [vmem:[#allocation8 + $0x20] sm:$0xff]
    %v193 = vld [vmem:[#allocation8 + $0x28] sm:$0xff]
    %v194 = vld [vmem:[#allocation8 + $0x30] sm:$0xff]
    %v195 = vld [vmem:[#allocation8 + $0x38] sm:$0xff]
    %v196 = vmul.f32 %v188, %v140
    %v197 = vmul.f32 %v189, %v141
    %v198 = vmul.f32 %v190, %v142
    %v199 = vmul.f32 %v191, %v143
    %v200 = vmul.f32 %v192, %v144
    %v201 = vmul.f32 %v193, %v145
    %v202 = vmul.f32 %v194, %v146
    %v203 = vmul.f32 %v195, %v147
    %s204 = sld [smem:[#allocation2]]
    %v205 = vstv %s204
    %v206 = vmul.f32 %v205, %v172
    %v207 = vmul.f32 %v205, %v173
    %v208 = vmul.f32 %v205, %v174
    %v209 = vmul.f32 %v205, %v175
    %v210 = vmul.f32 %v205, %v176
    %v211 = vmul.f32 %v205, %v177
    %v212 = vmul.f32 %v205, %v178
    %v213 = vmul.f32 %v205, %v179
    %v214 = vadd.f32 %v196, %v206
    %v215 = vadd.f32 %v197, %v207
    %v216 = vadd.f32 %v198, %v208
    %v217 = vadd.f32 %v199, %v209
    %v218 = vadd.f32 %v200, %v210
    %v219 = vadd.f32 %v201, %v211
    %v220 = vadd.f32 %v202, %v212
    %v221 = vadd.f32 %v203, %v213
    %vm222 = vcmask 523264
    %223 = vst.msk [vmem:[#allocation16] sm:$0xff] %vm222, %v214
    %224 = vst.msk [vmem:[#allocation16 + $0x8] sm:$0xff] %vm222, %v215
    %225 = vst.msk [vmem:[#allocation16 + $0x10] sm:$0xff] %vm222, %v216
    %226 = vst.msk [vmem:[#allocation16 + $0x18] sm:$0xff] %vm222, %v217
    %227 = vst.msk [vmem:[#allocation16 + $0x20] sm:$0xff] %vm222, %v218
    %228 = vst.msk [vmem:[#allocation16 + $0x28] sm:$0xff] %vm222, %v219
    %229 = vst.msk [vmem:[#allocation16 + $0x30] sm:$0xff] %vm222, %v220
    %230 = vst.msk [vmem:[#allocation16 + $0x38] sm:$0xff] %vm222, %v221
    %s231 = scalar_lea.vmem [#allocation7], 64
    %v232 = vld [vmem:[%s231] sm:$0xff]
    %v233 = vld [vmem:[%s231 + $0x8] sm:$0xff]
    %v234 = vld [vmem:[%s231 + $0x10] sm:$0xff]
    %v235 = vld [vmem:[%s231 + $0x18] sm:$0xff]
    %v236 = vld [vmem:[%s231 + $0x20] sm:$0xff]
    %v237 = vld [vmem:[%s231 + $0x28] sm:$0xff]
    %v238 = vld [vmem:[%s231 + $0x30] sm:$0xff]
    %v239 = vld [vmem:[%s231 + $0x38] sm:$0xff]
    %s240 = scalar_lea.vmem [#allocation8], 64
    %v241 = vld [vmem:[%s240] sm:$0xff]
    %v242 = vld [vmem:[%s240 + $0x8] sm:$0xff]
    %v243 = vld [vmem:[%s240 + $0x10] sm:$0xff]
    %v244 = vld [vmem:[%s240 + $0x18] sm:$0xff]
    %v245 = vld [vmem:[%s240 + $0x20] sm:$0xff]
    %v246 = vld [vmem:[%s240 + $0x28] sm:$0xff]
    %v247 = vld [vmem:[%s240 + $0x30] sm:$0xff]
    %v248 = vld [vmem:[%s240 + $0x38] sm:$0xff]
    %v249 = vmul.f32 %v241, %v140
    %v250 = vmul.f32 %v242, %v141
    %v251 = vmul.f32 %v243, %v142
    %v252 = vmul.f32 %v244, %v143
    %v253 = vmul.f32 %v245, %v144
    %v254 = vmul.f32 %v246, %v145
    %v255 = vmul.f32 %v247, %v146
    %v256 = vmul.f32 %v248, %v147
    %s257 = sld [smem:[#allocation2 + $0x1]]
    %v258 = vstv %s257
    %v259 = vmul.f32 %v258, %v172
    %v260 = vmul.f32 %v258, %v173
    %v261 = vmul.f32 %v258, %v174
    %v262 = vmul.f32 %v258, %v175
    %v263 = vmul.f32 %v258, %v176
    %v264 = vmul.f32 %v258, %v177
    %v265 = vmul.f32 %v258, %v178
    %v266 = vmul.f32 %v258, %v179
    %v267 = vadd.f32 %v249, %v259
    %v268 = vadd.f32 %v250, %v260
    %v269 = vadd.f32 %v251, %v261
    %v270 = vadd.f32 %v252, %v262
    %v271 = vadd.f32 %v253, %v263
    %v272 = vadd.f32 %v254, %v264
    %v273 = vadd.f32 %v255, %v265
    %v274 = vadd.f32 %v256, %v266
    %s275 = scalar_lea.vmem [#allocation16], 64
    %276 = vst.msk [vmem:[%s275] sm:$0xff] %vm222, %v267
    %277 = vst.msk [vmem:[%s275 + $0x8] sm:$0xff] %vm222, %v268
    %278 = vst.msk [vmem:[%s275 + $0x10] sm:$0xff] %vm222, %v269
    %279 = vst.msk [vmem:[%s275 + $0x18] sm:$0xff] %vm222, %v270
    %280 = vst.msk [vmem:[%s275 + $0x20] sm:$0xff] %vm222, %v271
    %281 = vst.msk [vmem:[%s275 + $0x28] sm:$0xff] %vm222, %v272
    %282 = vst.msk [vmem:[%s275 + $0x30] sm:$0xff] %vm222, %v273
    %283 = vst.msk [vmem:[%s275 + $0x38] sm:$0xff] %vm222, %v274
    %s284 = scalar_lea.vmem [#allocation7], 128
    %v285 = vld [vmem:[%s284] sm:$0xff]
    %v286 = vld [vmem:[%s284 + $0x8] sm:$0xff]
    %v287 = vld [vmem:[%s284 + $0x10] sm:$0xff]
    %v288 = vld [vmem:[%s284 + $0x18] sm:$0xff]
    %v289 = vld [vmem:[%s284 + $0x20] sm:$0xff]
    %v290 = vld [vmem:[%s284 + $0x28] sm:$0xff]
    %v291 = vld [vmem:[%s284 + $0x30] sm:$0xff]
    %v292 = vld [vmem:[%s284 + $0x38] sm:$0xff]
    %s293 = scalar_lea.vmem [#allocation8], 128
    %v294 = vld [vmem:[%s293] sm:$0xff]
    %v295 = vld [vmem:[%s293 + $0x8] sm:$0xff]
    %v296 = vld [vmem:[%s293 + $0x10] sm:$0xff]
    %v297 = vld [vmem:[%s293 + $0x18] sm:$0xff]
    %v298 = vld [vmem:[%s293 + $0x20] sm:$0xff]
    %v299 = vld [vmem:[%s293 + $0x28] sm:$0xff]
    %v300 = vld [vmem:[%s293 + $0x30] sm:$0xff]
    %v301 = vld [vmem:[%s293 + $0x38] sm:$0xff]
    %v302 = vmul.f32 %v294, %v140
    %v303 = vmul.f32 %v295, %v141
    %v304 = vmul.f32 %v296, %v142
    %v305 = vmul.f32 %v297, %v143
    %v306 = vmul.f32 %v298, %v144
    %v307 = vmul.f32 %v299, %v145
    %v308 = vmul.f32 %v300, %v146
    %v309 = vmul.f32 %v301, %v147
    %s310 = sld [smem:[#allocation2 + $0x2]]
    %v311 = vstv %s310
    %v312 = vmul.f32 %v311, %v172
    %v313 = vmul.f32 %v311, %v173
    %v314 = vmul.f32 %v311, %v174
    %v315 = vmul.f32 %v311, %v175
    %v316 = vmul.f32 %v311, %v176
    %v317 = vmul.f32 %v311, %v177
    %v318 = vmul.f32 %v311, %v178
    %v319 = vmul.f32 %v311, %v179
    %v320 = vadd.f32 %v302, %v312
    %v321 = vadd.f32 %v303, %v313
    %v322 = vadd.f32 %v304, %v314
    %v323 = vadd.f32 %v305, %v315
    %v324 = vadd.f32 %v306, %v316
    %v325 = vadd.f32 %v307, %v317
    %v326 = vadd.f32 %v308, %v318
    %v327 = vadd.f32 %v309, %v319
    %s328 = scalar_lea.vmem [#allocation16], 128
    %329 = vst.msk [vmem:[%s328] sm:$0xff] %vm222, %v320
    %330 = vst.msk [vmem:[%s328 + $0x8] sm:$0xff] %vm222, %v321
    %331 = vst.msk [vmem:[%s328 + $0x10] sm:$0xff] %vm222, %v322
    %332 = vst.msk [vmem:[%s328 + $0x18] sm:$0xff] %vm222, %v323
    %333 = vst.msk [vmem:[%s328 + $0x20] sm:$0xff] %vm222, %v324
    %334 = vst.msk [vmem:[%s328 + $0x28] sm:$0xff] %vm222, %v325
    %335 = vst.msk [vmem:[%s328 + $0x30] sm:$0xff] %vm222, %v326
    %336 = vst.msk [vmem:[%s328 + $0x38] sm:$0xff] %vm222, %v327
    %v337 = vsub.f32 %v180, %v214
    %v338 = vsub.f32 %v181, %v215
    %v339 = vsub.f32 %v182, %v216
    %v340 = vsub.f32 %v183, %v217
    %v341 = vsub.f32 %v184, %v218
    %v342 = vsub.f32 %v185, %v219
    %v343 = vsub.f32 %v186, %v220
    %v344 = vsub.f32 %v187, %v221
    %v345 = vsub.f32 %v232, %v267
    %v346 = vsub.f32 %v233, %v268
    %v347 = vsub.f32 %v234, %v269
    %v348 = vsub.f32 %v235, %v270
    %v349 = vsub.f32 %v236, %v271
    %v350 = vsub.f32 %v237, %v272
    %v351 = vsub.f32 %v238, %v273
    %v352 = vsub.f32 %v239, %v274
    %v353 = vsub.f32 %v285, %v320
    %v354 = vsub.f32 %v286, %v321
    %v355 = vsub.f32 %v287, %v322
    %v356 = vsub.f32 %v288, %v323
    %v357 = vsub.f32 %v289, %v324
    %v358 = vsub.f32 %v290, %v325
    %v359 = vsub.f32 %v291, %v326
    %v360 = vsub.f32 %v292, %v327
    %v361 = vand.u32 2147483647, %v337
    %v362 = vand.u32 2147483647, %v338
    %v363 = vand.u32 2147483647, %v339
    %v364 = vand.u32 2147483647, %v340
    %v365 = vand.u32 2147483647, %v341
    %v366 = vand.u32 2147483647, %v342
    %v367 = vand.u32 2147483647, %v343
    %v368 = vand.u32 2147483647, %v344
    %v369 = vand.u32 2147483647, %v345
    %v370 = vand.u32 2147483647, %v346
    %v371 = vand.u32 2147483647, %v347
    %v372 = vand.u32 2147483647, %v348
    %v373 = vand.u32 2147483647, %v349
    %v374 = vand.u32 2147483647, %v350
    %v375 = vand.u32 2147483647, %v351
    %v376 = vand.u32 2147483647, %v352
    %v377 = vand.u32 2147483647, %v353
    %v378 = vand.u32 2147483647, %v354
    %v379 = vand.u32 2147483647, %v355
    %v380 = vand.u32 2147483647, %v356
    %v381 = vand.u32 2147483647, %v357
    %v382 = vand.u32 2147483647, %v358
    %v383 = vand.u32 2147483647, %v359
    %v384 = vand.u32 2147483647, %v360
    %v385 = vmul.f32 %v361, %v148
    %v386 = vmul.f32 %v362, %v149
    %v387 = vmul.f32 %v363, %v150
    %v388 = vmul.f32 %v364, %v151
    %v389 = vmul.f32 %v365, %v152
    %v390 = vmul.f32 %v366, %v153
    %v391 = vmul.f32 %v367, %v154
    %v392 = vmul.f32 %v368, %v155
    %v393 = vmul.f32 %v369, %v148
    %v394 = vmul.f32 %v370, %v149
    %v395 = vmul.f32 %v371, %v150
    %v396 = vmul.f32 %v372, %v151
    %v397 = vmul.f32 %v373, %v152
    %v398 = vmul.f32 %v374, %v153
    %v399 = vmul.f32 %v375, %v154
    %v400 = vmul.f32 %v376, %v155
    %v401 = vmul.f32 %v377, %v148
    %v402 = vmul.f32 %v378, %v149
    %v403 = vmul.f32 %v379, %v150
    %v404 = vmul.f32 %v380, %v151
    %v405 = vmul.f32 %v381, %v152
    %v406 = vmul.f32 %v382, %v153
    %v407 = vmul.f32 %v383, %v154
    %v408 = vmul.f32 %v384, %v155
    %v409 = vsel %vm222, %v385, 0.0
    %v410 = vsel %vm222, %v386, 0.0
    %v411 = vadd.f32 %v409, %v410
    %v412 = vsel %vm222, %v387, 0.0
    %v413 = vadd.f32 %v411, %v412
    %v414 = vsel %vm222, %v388, 0.0
    %v415 = vadd.f32 %v413, %v414
    %v416 = vsel %vm222, %v389, 0.0
    %v417 = vadd.f32 %v415, %v416
    %v418 = vsel %vm222, %v390, 0.0
    %v419 = vadd.f32 %v417, %v418
    %v420 = vsel %vm222, %v391, 0.0
    %v421 = vadd.f32 %v419, %v420
    %v422 = vsel %vm222, %v392, 0.0
    %v423 = vadd.f32 %v421, %v422
    %v424 = vsel %vm222, %v393, 0.0
    %v425 = vadd.f32 %v423, %v424
    %v426 = vsel %vm222, %v394, 0.0
    %v427 = vadd.f32 %v425, %v426
    %v428 = vsel %vm222, %v395, 0.0
    %v429 = vadd.f32 %v427, %v428
    %v430 = vsel %vm222, %v396, 0.0
    %v431 = vadd.f32 %v429, %v430
    %v432 = vsel %vm222, %v397, 0.0
    %v433 = vadd.f32 %v431, %v432
    %v434 = vsel %vm222, %v398, 0.0
    %v435 = vadd.f32 %v433, %v434
    %v436 = vsel %vm222, %v399, 0.0
    %v437 = vadd.f32 %v435, %v436
    %v438 = vsel %vm222, %v400, 0.0
    %v439 = vadd.f32 %v437, %v438
    %v440 = vsel %vm222, %v401, 0.0
    %v441 = vadd.f32 %v439, %v440
    %v442 = vsel %vm222, %v402, 0.0
    %v443 = vadd.f32 %v441, %v442
    %v444 = vsel %vm222, %v403, 0.0
    %v445 = vadd.f32 %v443, %v444
    %v446 = vsel %vm222, %v404, 0.0
    %v447 = vadd.f32 %v445, %v446
    %v448 = vsel %vm222, %v405, 0.0
    %v449 = vadd.f32 %v447, %v448
    %v450 = vsel %vm222, %v406, 0.0
    %v451 = vadd.f32 %v449, %v450
    %v452 = vsel %vm222, %v407, 0.0
    %v453 = vadd.f32 %v451, %v452
    %v454 = vsel %vm222, %v408, 0.0
    %v455 = vadd.f32 %v453, %v454
    %456 = vadd.xlane.f32.xlu0 %v455
    %v457 = vpop.xlane.xlu0 %456
    %v458 = vrot.slane %v457, 4
    %v459 = vadd.f32 %v457, %v458
    %v460 = vrot.slane %v459, 2
    %v461 = vadd.f32 %v459, %v460
    %v462 = vrot.slane %v461, 1
    %v463 = vadd.f32 %v461, %v462
    %s464 = vtos %v463
    %s465 = scalar_lea.smem [#allocation17], 0
    %466 = sst [smem:[%s465]] %s464
    %v467 = vsel %vm222, %v148, 0.0
    %v468 = vsel %vm222, %v149, 0.0
    %v469 = vadd.f32 %v467, %v468
    %v470 = vsel %vm222, %v150, 0.0
    %v471 = vadd.f32 %v469, %v470
    %v472 = vsel %vm222, %v151, 0.0
    %v473 = vadd.f32 %v471, %v472
    %v474 = vsel %vm222, %v152, 0.0
    %v475 = vadd.f32 %v473, %v474
    %v476 = vsel %vm222, %v153, 0.0
    %v477 = vadd.f32 %v475, %v476
    %v478 = vsel %vm222, %v154, 0.0
    %v479 = vadd.f32 %v477, %v478
    %v480 = vsel %vm222, %v155, 0.0
    %v481 = vadd.f32 %v479, %v480
    %482 = vadd.xlane.f32.xlu0 %v481
    %v483 = vpop.xlane.xlu0 %482
    %v484 = vrot.slane %v483, 4
    %v485 = vadd.f32 %v483, %v484
    %v486 = vrot.slane %v485, 2
    %v487 = vadd.f32 %v485, %v486
    %v488 = vrot.slane %v487, 1
    %v489 = vadd.f32 %v487, %v488
    %s490 = vtos %v489
    %s491 = scalar_lea.smem [#allocation20], 0
    %492 = sst [smem:[%s491]] %s490
    %v493 = vmul.f32 %v180, %v180
    %v494 = vmul.f32 %v181, %v181
    %v495 = vmul.f32 %v182, %v182
    %v496 = vmul.f32 %v183, %v183
    %v497 = vmul.f32 %v184, %v184
    %v498 = vmul.f32 %v185, %v185
    %v499 = vmul.f32 %v186, %v186
    %v500 = vmul.f32 %v187, %v187
    %v501 = vmul.f32 %v232, %v232
    %v502 = vmul.f32 %v233, %v233
    %v503 = vmul.f32 %v234, %v234
    %v504 = vmul.f32 %v235, %v235
    %v505 = vmul.f32 %v236, %v236
    %v506 = vmul.f32 %v237, %v237
    %v507 = vmul.f32 %v238, %v238
    %v508 = vmul.f32 %v239, %v239
    %v509 = vmul.f32 %v285, %v285
    %v510 = vmul.f32 %v286, %v286
    %v511 = vmul.f32 %v287, %v287
    %v512 = vmul.f32 %v288, %v288
    %v513 = vmul.f32 %v289, %v289
    %v514 = vmul.f32 %v290, %v290
    %v515 = vmul.f32 %v291, %v291
    %v516 = vmul.f32 %v292, %v292
    %v517 = vmul.f32 %v214, %v214
    %v518 = vmul.f32 %v215, %v215
    %v519 = vmul.f32 %v216, %v216
    %v520 = vmul.f32 %v217, %v217
    %v521 = vmul.f32 %v218, %v218
    %v522 = vmul.f32 %v219, %v219
    %v523 = vmul.f32 %v220, %v220
    %v524 = vmul.f32 %v221, %v221
    %v525 = vmul.f32 %v267, %v267
    %v526 = vmul.f32 %v268, %v268
    %v527 = vmul.f32 %v269, %v269
    %v528 = vmul.f32 %v270, %v270
    %v529 = vmul.f32 %v271, %v271
    %v530 = vmul.f32 %v272, %v272
    %v531 = vmul.f32 %v273, %v273
    %v532 = vmul.f32 %v274, %v274
    %v533 = vmul.f32 %v320, %v320
    %v534 = vmul.f32 %v321, %v321
    %v535 = vmul.f32 %v322, %v322
    %v536 = vmul.f32 %v323, %v323
    %v537 = vmul.f32 %v324, %v324
    %v538 = vmul.f32 %v325, %v325
    %v539 = vmul.f32 %v326, %v326
    %v540 = vmul.f32 %v327, %v327
    %v541 = vmul.f32 %v180, %v214
    %v542 = vmul.f32 %v181, %v215
    %v543 = vmul.f32 %v182, %v216
    %v544 = vmul.f32 %v183, %v217
    %v545 = vmul.f32 %v184, %v218
    %v546 = vmul.f32 %v185, %v219
    %v547 = vmul.f32 %v186, %v220
    %v548 = vmul.f32 %v187, %v221
    %v549 = vmul.f32 %v232, %v267
    %v550 = vmul.f32 %v233, %v268
    %v551 = vmul.f32 %v234, %v269
    %v552 = vmul.f32 %v235, %v270
    %v553 = vmul.f32 %v236, %v271
    %v554 = vmul.f32 %v237, %v272
    %v555 = vmul.f32 %v238, %v273
    %v556 = vmul.f32 %v239, %v274
    %v557 = vmul.f32 %v285, %v320
    %v558 = vmul.f32 %v286, %v321
    %v559 = vmul.f32 %v287, %v322
    %v560 = vmul.f32 %v288, %v323
    %v561 = vmul.f32 %v289, %v324
    %v562 = vmul.f32 %v290, %v325
    %v563 = vmul.f32 %v291, %v326
    %v564 = vmul.f32 %v292, %v327
    %v566 = vsel %vm222, %v180, 0
    %v569 = vsel %vm222, %v181, 0
    %v572 = vsel %vm222, %v182, 0
    %v575 = vsel %vm222, %v183, 0
    %v578 = vsel %vm222, %v184, 0
    %v581 = vsel %vm222, %v185, 0
    %v584 = vsel %vm222, %v186, 0
    %v587 = vsel %vm222, %v187, 0
    %v590 = vsel %vm222, %v232, 0
    %v593 = vsel %vm222, %v233, 0
    %v596 = vsel %vm222, %v234, 0
    %v599 = vsel %vm222, %v235, 0
    %v602 = vsel %vm222, %v236, 0
    %v605 = vsel %vm222, %v237, 0
    %v608 = vsel %vm222, %v238, 0
    %v611 = vsel %vm222, %v239, 0
    %v614 = vsel %vm222, %v285, 0
    %v617 = vsel %vm222, %v286, 0
    %v620 = vsel %vm222, %v287, 0
    %v623 = vsel %vm222, %v288, 0
    %v626 = vsel %vm222, %v289, 0
    %v629 = vsel %vm222, %v290, 0
    %v632 = vsel %vm222, %v291, 0
    %v635 = vsel %vm222, %v292, 0
    %v638 = vsel %vm222, %v214, 0
    %v641 = vsel %vm222, %v215, 0
    %v644 = vsel %vm222, %v216, 0
    %v647 = vsel %vm222, %v217, 0
    %v650 = vsel %vm222, %v218, 0
    %v653 = vsel %vm222, %v219, 0
    %v656 = vsel %vm222, %v220, 0
    %v659 = vsel %vm222, %v221, 0
    %v662 = vsel %vm222, %v267, 0
    %v665 = vsel %vm222, %v268, 0
    %v668 = vsel %vm222, %v269, 0
    %v671 = vsel %vm222, %v270, 0
    %v674 = vsel %vm222, %v271, 0
    %v677 = vsel %vm222, %v272, 0
    %v680 = vsel %vm222, %v273, 0
    %v683 = vsel %vm222, %v274, 0
    %v686 = vsel %vm222, %v320, 0
    %v689 = vsel %vm222, %v321, 0
    %v692 = vsel %vm222, %v322, 0
    %v695 = vsel %vm222, %v323, 0
    %v698 = vsel %vm222, %v324, 0
    %v701 = vsel %vm222, %v325, 0
    %v704 = vsel %vm222, %v326, 0
    %v707 = vsel %vm222, %v327, 0
    %v710 = vsel %vm222, %v493, 0
    %v713 = vsel %vm222, %v494, 0
    %v716 = vsel %vm222, %v495, 0
    %v719 = vsel %vm222, %v496, 0
    %v722 = vsel %vm222, %v497, 0
    %v725 = vsel %vm222, %v498, 0
    %v728 = vsel %vm222, %v499, 0
    %v731 = vsel %vm222, %v500, 0
    %v734 = vsel %vm222, %v501, 0
    %v737 = vsel %vm222, %v502, 0
    %v740 = vsel %vm222, %v503, 0
    %v743 = vsel %vm222, %v504, 0
    %v746 = vsel %vm222, %v505, 0
    %v749 = vsel %vm222, %v506, 0
    %v752 = vsel %vm222, %v507, 0
    %v755 = vsel %vm222, %v508, 0
    %v758 = vsel %vm222, %v509, 0
    %v761 = vsel %vm222, %v510, 0
    %v764 = vsel %vm222, %v511, 0
    %v767 = vsel %vm222, %v512, 0
    %v770 = vsel %vm222, %v513, 0
    %v773 = vsel %vm222, %v514, 0
    %v776 = vsel %vm222, %v515, 0
    %v779 = vsel %vm222, %v516, 0
    %v782 = vsel %vm222, %v517, 0
    %v785 = vsel %vm222, %v518, 0
    %v788 = vsel %vm222, %v519, 0
    %v791 = vsel %vm222, %v520, 0
    %v794 = vsel %vm222, %v521, 0
    %v797 = vsel %vm222, %v522, 0
    %v800 = vsel %vm222, %v523, 0
    %v803 = vsel %vm222, %v524, 0
    %v806 = vsel %vm222, %v525, 0
    %v809 = vsel %vm222, %v526, 0
    %v812 = vsel %vm222, %v527, 0
    %v815 = vsel %vm222, %v528, 0
    %v818 = vsel %vm222, %v529, 0
    %v821 = vsel %vm222, %v530, 0
    %v824 = vsel %vm222, %v531, 0
    %v827 = vsel %vm222, %v532, 0
    %v830 = vsel %vm222, %v533, 0
    %v833 = vsel %vm222, %v534, 0
    %v836 = vsel %vm222, %v535, 0
    %v839 = vsel %vm222, %v536, 0
    %v842 = vsel %vm222, %v537, 0
    %v845 = vsel %vm222, %v538, 0
    %v848 = vsel %vm222, %v539, 0
    %v851 = vsel %vm222, %v540, 0
    %v854 = vsel %vm222, %v541, 0
    %v857 = vsel %vm222, %v542, 0
    %v860 = vsel %vm222, %v543, 0
    %v863 = vsel %vm222, %v544, 0
    %v866 = vsel %vm222, %v545, 0
    %v869 = vsel %vm222, %v546, 0
    %v872 = vsel %vm222, %v547, 0
    %v875 = vsel %vm222, %v548, 0
    %v878 = vsel %vm222, %v549, 0
    %v881 = vsel %vm222, %v550, 0
    %v884 = vsel %vm222, %v551, 0
    %v887 = vsel %vm222, %v552, 0
    %v890 = vsel %vm222, %v553, 0
    %v893 = vsel %vm222, %v554, 0
    %v896 = vsel %vm222, %v555, 0
    %v899 = vsel %vm222, %v556, 0
    %v902 = vsel %vm222, %v557, 0
    %v905 = vsel %vm222, %v558, 0
    %v908 = vsel %vm222, %v559, 0
    %v911 = vsel %vm222, %v560, 0
    %v914 = vsel %vm222, %v561, 0
    %v917 = vsel %vm222, %v562, 0
    %v920 = vsel %vm222, %v563, 0
    %v923 = vsel %vm222, %v564, 0
    %925 = vmatpush.msra.mxu0 0.0
    %926 = vmatpush.msra.mxu0 0.0
    %927 = vmatpush.msra.mxu0 0.0
    %928 = vmatpush.msra.mxu0 0.0
    %929 = vmatpush.msra.mxu0 0.0
    %930 = vmatpush.msra.mxu0 0.0
    %931 = vmatpush.msra.mxu0 0.0
    %932 = vmatpush.msra.mxu0 0.0
    %933 = vmatpush.msra.mxu0 %v171
    %934 = vmatpush.msra.mxu0 %v170
    %935 = vmatpush.msra.mxu0 %v169
    %936 = vmatpush.msra.mxu0 %v168
    %937 = vmatpush.msra.mxu0 %v167
    %938 = vmatpush.msra.mxu0 %v166
    %939 = vmatpush.msra.mxu0 %v165
    %940 = vmatpush.msra.mxu0 %v164
    %941 = vmatmul.f32.gmra.mxu0 %v566
    %v942 = vpop.f32.mrf.mxu0
    %v943 = vadd.f32 0.0, %v942
    %944 = vmatmul.f32.gmra.mxu0 %v569
    %v945 = vpop.f32.mrf.mxu0
    %v946 = vadd.f32 0.0, %v945
    %947 = vmatmul.f32.gmra.mxu0 %v572
    %v948 = vpop.f32.mrf.mxu0
    %v949 = vadd.f32 0.0, %v948
    %950 = vmatmul.f32.gmra.mxu0 %v575
    %v951 = vpop.f32.mrf.mxu0
    %v952 = vadd.f32 0.0, %v951
    %953 = vmatmul.f32.gmra.mxu0 %v578
    %v954 = vpop.f32.mrf.mxu0
    %v955 = vadd.f32 0.0, %v954
    %956 = vmatmul.f32.gmra.mxu0 %v581
    %v957 = vpop.f32.mrf.mxu0
    %v958 = vadd.f32 0.0, %v957
    %959 = vmatmul.f32.gmra.mxu0 %v584
    %v960 = vpop.f32.mrf.mxu0
    %v961 = vadd.f32 0.0, %v960
    %962 = vmatmul.f32.gmra.mxu0 %v587
    %v963 = vpop.f32.mrf.mxu0
    %v964 = vadd.f32 0.0, %v963
    %965 = vmatmul.f32.gmra.mxu0 %v590
    %v966 = vpop.f32.mrf.mxu0
    %v967 = vadd.f32 0.0, %v966
    %968 = vmatmul.f32.gmra.mxu0 %v593
    %v969 = vpop.f32.mrf.mxu0
    %v970 = vadd.f32 0.0, %v969
    %971 = vmatmul.f32.gmra.mxu0 %v596
    %v972 = vpop.f32.mrf.mxu0
    %v973 = vadd.f32 0.0, %v972
    %974 = vmatmul.f32.gmra.mxu0 %v599
    %v975 = vpop.f32.mrf.mxu0
    %v976 = vadd.f32 0.0, %v975
    %977 = vmatmul.f32.gmra.mxu0 %v602
    %v978 = vpop.f32.mrf.mxu0
    %v979 = vadd.f32 0.0, %v978
    %980 = vmatmul.f32.gmra.mxu0 %v605
    %v981 = vpop.f32.mrf.mxu0
    %v982 = vadd.f32 0.0, %v981
    %983 = vmatmul.f32.gmra.mxu0 %v608
    %v984 = vpop.f32.mrf.mxu0
    %v985 = vadd.f32 0.0, %v984
    %986 = vmatmul.f32.gmra.mxu0 %v611
    %v987 = vpop.f32.mrf.mxu0
    %v988 = vadd.f32 0.0, %v987
    %989 = vmatmul.f32.gmra.mxu0 %v614
    %v990 = vpop.f32.mrf.mxu0
    %v991 = vadd.f32 0.0, %v990
    %992 = vmatmul.f32.gmra.mxu0 %v617
    %v993 = vpop.f32.mrf.mxu0
    %v994 = vadd.f32 0.0, %v993
    %995 = vmatmul.f32.gmra.mxu0 %v620
    %v996 = vpop.f32.mrf.mxu0
    %v997 = vadd.f32 0.0, %v996
    %998 = vmatmul.f32.gmra.mxu0 %v623
    %v999 = vpop.f32.mrf.mxu0
    %v1000 = vadd.f32 0.0, %v999
    %1001 = vmatmul.f32.gmra.mxu0 %v626
    %v1002 = vpop.f32.mrf.mxu0
    %v1003 = vadd.f32 0.0, %v1002
    %1004 = vmatmul.f32.gmra.mxu0 %v629
    %v1005 = vpop.f32.mrf.mxu0
    %v1006 = vadd.f32 0.0, %v1005
    %1007 = vmatmul.f32.gmra.mxu0 %v632
    %v1008 = vpop.f32.mrf.mxu0
    %v1009 = vadd.f32 0.0, %v1008
    %1010 = vmatmul.f32.gmra.mxu0 %v635
    %v1011 = vpop.f32.mrf.mxu0
    %v1012 = vadd.f32 0.0, %v1011
    %1013 = vmatmul.f32.gmra.mxu0 %v638
    %v1014 = vpop.f32.mrf.mxu0
    %v1015 = vadd.f32 0.0, %v1014
    %1016 = vmatmul.f32.gmra.mxu0 %v641
    %v1017 = vpop.f32.mrf.mxu0
    %v1018 = vadd.f32 0.0, %v1017
    %1019 = vmatmul.f32.gmra.mxu0 %v644
    %v1020 = vpop.f32.mrf.mxu0
    %v1021 = vadd.f32 0.0, %v1020
    %1022 = vmatmul.f32.gmra.mxu0 %v647
    %v1023 = vpop.f32.mrf.mxu0
    %v1024 = vadd.f32 0.0, %v1023
    %1025 = vmatmul.f32.gmra.mxu0 %v650
    %v1026 = vpop.f32.mrf.mxu0
    %v1027 = vadd.f32 0.0, %v1026
    %1028 = vmatmul.f32.gmra.mxu0 %v653
    %v1029 = vpop.f32.mrf.mxu0
    %v1030 = vadd.f32 0.0, %v1029
    %1031 = vmatmul.f32.gmra.mxu0 %v656
    %v1032 = vpop.f32.mrf.mxu0
    %v1033 = vadd.f32 0.0, %v1032
    %1034 = vmatmul.f32.gmra.mxu0 %v659
    %v1035 = vpop.f32.mrf.mxu0
    %v1036 = vadd.f32 0.0, %v1035
    %1037 = vmatmul.f32.gmra.mxu0 %v662
    %v1038 = vpop.f32.mrf.mxu0
    %v1039 = vadd.f32 0.0, %v1038
    %1040 = vmatmul.f32.gmra.mxu0 %v665
    %v1041 = vpop.f32.mrf.mxu0
    %v1042 = vadd.f32 0.0, %v1041
    %1043 = vmatmul.f32.gmra.mxu0 %v668
    %v1044 = vpop.f32.mrf.mxu0
    %v1045 = vadd.f32 0.0, %v1044
    %1046 = vmatmul.f32.gmra.mxu0 %v671
    %v1047 = vpop.f32.mrf.mxu0
    %v1048 = vadd.f32 0.0, %v1047
    %1049 = vmatmul.f32.gmra.mxu0 %v674
    %v1050 = vpop.f32.mrf.mxu0
    %v1051 = vadd.f32 0.0, %v1050
    %1052 = vmatmul.f32.gmra.mxu0 %v677
    %v1053 = vpop.f32.mrf.mxu0
    %v1054 = vadd.f32 0.0, %v1053
    %1055 = vmatmul.f32.gmra.mxu0 %v680
    %v1056 = vpop.f32.mrf.mxu0
    %v1057 = vadd.f32 0.0, %v1056
    %1058 = vmatmul.f32.gmra.mxu0 %v683
    %v1059 = vpop.f32.mrf.mxu0
    %v1060 = vadd.f32 0.0, %v1059
    %1061 = vmatmul.f32.gmra.mxu0 %v686
    %v1062 = vpop.f32.mrf.mxu0
    %v1063 = vadd.f32 0.0, %v1062
    %1064 = vmatmul.f32.gmra.mxu0 %v689
    %v1065 = vpop.f32.mrf.mxu0
    %v1066 = vadd.f32 0.0, %v1065
    %1067 = vmatmul.f32.gmra.mxu0 %v692
    %v1068 = vpop.f32.mrf.mxu0
    %v1069 = vadd.f32 0.0, %v1068
    %1070 = vmatmul.f32.gmra.mxu0 %v695
    %v1071 = vpop.f32.mrf.mxu0
    %v1072 = vadd.f32 0.0, %v1071
    %1073 = vmatmul.f32.gmra.mxu0 %v698
    %v1074 = vpop.f32.mrf.mxu0
    %v1075 = vadd.f32 0.0, %v1074
    %1076 = vmatmul.f32.gmra.mxu0 %v701
    %v1077 = vpop.f32.mrf.mxu0
    %v1078 = vadd.f32 0.0, %v1077
    %1079 = vmatmul.f32.gmra.mxu0 %v704
    %v1080 = vpop.f32.mrf.mxu0
    %v1081 = vadd.f32 0.0, %v1080
    %1082 = vmatmul.f32.gmra.mxu0 %v707
    %v1083 = vpop.f32.mrf.mxu0
    %v1084 = vadd.f32 0.0, %v1083
    %1085 = vmatmul.f32.gmra.mxu0 %v710
    %v1086 = vpop.f32.mrf.mxu0
    %v1087 = vadd.f32 0.0, %v1086
    %1088 = vmatmul.f32.gmra.mxu0 %v713
    %v1089 = vpop.f32.mrf.mxu0
    %v1090 = vadd.f32 0.0, %v1089
    %1091 = vmatmul.f32.gmra.mxu0 %v716
    %v1092 = vpop.f32.mrf.mxu0
    %v1093 = vadd.f32 0.0, %v1092
    %1094 = vmatmul.f32.gmra.mxu0 %v719
    %v1095 = vpop.f32.mrf.mxu0
    %v1096 = vadd.f32 0.0, %v1095
    %1097 = vmatmul.f32.gmra.mxu0 %v722
    %v1098 = vpop.f32.mrf.mxu0
    %v1099 = vadd.f32 0.0, %v1098
    %1100 = vmatmul.f32.gmra.mxu0 %v725
    %v1101 = vpop.f32.mrf.mxu0
    %v1102 = vadd.f32 0.0, %v1101
    %1103 = vmatmul.f32.gmra.mxu0 %v728
    %v1104 = vpop.f32.mrf.mxu0
    %v1105 = vadd.f32 0.0, %v1104
    %1106 = vmatmul.f32.gmra.mxu0 %v731
    %v1107 = vpop.f32.mrf.mxu0
    %v1108 = vadd.f32 0.0, %v1107
    %1109 = vmatmul.f32.gmra.mxu0 %v734
    %v1110 = vpop.f32.mrf.mxu0
    %v1111 = vadd.f32 0.0, %v1110
    %1112 = vmatmul.f32.gmra.mxu0 %v737
    %v1113 = vpop.f32.mrf.mxu0
    %v1114 = vadd.f32 0.0, %v1113
    %1115 = vmatmul.f32.gmra.mxu0 %v740
    %v1116 = vpop.f32.mrf.mxu0
    %v1117 = vadd.f32 0.0, %v1116
    %1118 = vmatmul.f32.gmra.mxu0 %v743
    %v1119 = vpop.f32.mrf.mxu0
    %v1120 = vadd.f32 0.0, %v1119
    %1121 = vmatmul.f32.gmra.mxu0 %v746
    %v1122 = vpop.f32.mrf.mxu0
    %v1123 = vadd.f32 0.0, %v1122
    %1124 = vmatmul.f32.gmra.mxu0 %v749
    %v1125 = vpop.f32.mrf.mxu0
    %v1126 = vadd.f32 0.0, %v1125
    %1127 = vmatmul.f32.gmra.mxu0 %v752
    %v1128 = vpop.f32.mrf.mxu0
    %v1129 = vadd.f32 0.0, %v1128
    %1130 = vmatmul.f32.gmra.mxu0 %v755
    %v1131 = vpop.f32.mrf.mxu0
    %v1132 = vadd.f32 0.0, %v1131
    %1133 = vmatmul.f32.gmra.mxu0 %v758
    %v1134 = vpop.f32.mrf.mxu0
    %v1135 = vadd.f32 0.0, %v1134
    %1136 = vmatmul.f32.gmra.mxu0 %v761
    %v1137 = vpop.f32.mrf.mxu0
    %v1138 = vadd.f32 0.0, %v1137
    %1139 = vmatmul.f32.gmra.mxu0 %v764
    %v1140 = vpop.f32.mrf.mxu0
    %v1141 = vadd.f32 0.0, %v1140
    %1142 = vmatmul.f32.gmra.mxu0 %v767
    %v1143 = vpop.f32.mrf.mxu0
    %v1144 = vadd.f32 0.0, %v1143
    %1145 = vmatmul.f32.gmra.mxu0 %v770
    %v1146 = vpop.f32.mrf.mxu0
    %v1147 = vadd.f32 0.0, %v1146
    %1148 = vmatmul.f32.gmra.mxu0 %v773
    %v1149 = vpop.f32.mrf.mxu0
    %v1150 = vadd.f32 0.0, %v1149
    %1151 = vmatmul.f32.gmra.mxu0 %v776
    %v1152 = vpop.f32.mrf.mxu0
    %v1153 = vadd.f32 0.0, %v1152
    %1154 = vmatmul.f32.gmra.mxu0 %v779
    %v1155 = vpop.f32.mrf.mxu0
    %v1156 = vadd.f32 0.0, %v1155
    %1157 = vmatmul.f32.gmra.mxu0 %v782
    %v1158 = vpop.f32.mrf.mxu0
    %v1159 = vadd.f32 0.0, %v1158
    %1160 = vmatmul.f32.gmra.mxu0 %v785
    %v1161 = vpop.f32.mrf.mxu0
    %v1162 = vadd.f32 0.0, %v1161
    %1163 = vmatmul.f32.gmra.mxu0 %v788
    %v1164 = vpop.f32.mrf.mxu0
    %v1165 = vadd.f32 0.0, %v1164
    %1166 = vmatmul.f32.gmra.mxu0 %v791
    %v1167 = vpop.f32.mrf.mxu0
    %v1168 = vadd.f32 0.0, %v1167
    %1169 = vmatmul.f32.gmra.mxu0 %v794
    %v1170 = vpop.f32.mrf.mxu0
    %v1171 = vadd.f32 0.0, %v1170
    %1172 = vmatmul.f32.gmra.mxu0 %v797
    %v1173 = vpop.f32.mrf.mxu0
    %v1174 = vadd.f32 0.0, %v1173
    %1175 = vmatmul.f32.gmra.mxu0 %v800
    %v1176 = vpop.f32.mrf.mxu0
    %v1177 = vadd.f32 0.0, %v1176
    %1178 = vmatmul.f32.gmra.mxu0 %v803
    %v1179 = vpop.f32.mrf.mxu0
    %v1180 = vadd.f32 0.0, %v1179
    %1181 = vmatmul.f32.gmra.mxu0 %v806
    %v1182 = vpop.f32.mrf.mxu0
    %v1183 = vadd.f32 0.0, %v1182
    %1184 = vmatmul.f32.gmra.mxu0 %v809
    %v1185 = vpop.f32.mrf.mxu0
    %v1186 = vadd.f32 0.0, %v1185
    %1187 = vmatmul.f32.gmra.mxu0 %v812
    %v1188 = vpop.f32.mrf.mxu0
    %v1189 = vadd.f32 0.0, %v1188
    %1190 = vmatmul.f32.gmra.mxu0 %v815
    %v1191 = vpop.f32.mrf.mxu0
    %v1192 = vadd.f32 0.0, %v1191
    %1193 = vmatmul.f32.gmra.mxu0 %v818
    %v1194 = vpop.f32.mrf.mxu0
    %v1195 = vadd.f32 0.0, %v1194
    %1196 = vmatmul.f32.gmra.mxu0 %v821
    %v1197 = vpop.f32.mrf.mxu0
    %v1198 = vadd.f32 0.0, %v1197
    %1199 = vmatmul.f32.gmra.mxu0 %v824
    %v1200 = vpop.f32.mrf.mxu0
    %v1201 = vadd.f32 0.0, %v1200
    %1202 = vmatmul.f32.gmra.mxu0 %v827
    %v1203 = vpop.f32.mrf.mxu0
    %v1204 = vadd.f32 0.0, %v1203
    %1205 = vmatmul.f32.gmra.mxu0 %v830
    %v1206 = vpop.f32.mrf.mxu0
    %v1207 = vadd.f32 0.0, %v1206
    %1208 = vmatmul.f32.gmra.mxu0 %v833
    %v1209 = vpop.f32.mrf.mxu0
    %v1210 = vadd.f32 0.0, %v1209
    %1211 = vmatmul.f32.gmra.mxu0 %v836
    %v1212 = vpop.f32.mrf.mxu0
    %v1213 = vadd.f32 0.0, %v1212
    %1214 = vmatmul.f32.gmra.mxu0 %v839
    %v1215 = vpop.f32.mrf.mxu0
    %v1216 = vadd.f32 0.0, %v1215
    %1217 = vmatmul.f32.gmra.mxu0 %v842
    %v1218 = vpop.f32.mrf.mxu0
    %v1219 = vadd.f32 0.0, %v1218
    %1220 = vmatmul.f32.gmra.mxu0 %v845
    %v1221 = vpop.f32.mrf.mxu0
    %v1222 = vadd.f32 0.0, %v1221
    %1223 = vmatmul.f32.gmra.mxu0 %v848
    %v1224 = vpop.f32.mrf.mxu0
    %v1225 = vadd.f32 0.0, %v1224
    %1226 = vmatmul.f32.gmra.mxu0 %v851
    %v1227 = vpop.f32.mrf.mxu0
    %v1228 = vadd.f32 0.0, %v1227
    %1229 = vmatmul.f32.gmra.mxu0 %v854
    %v1230 = vpop.f32.mrf.mxu0
    %v1231 = vadd.f32 0.0, %v1230
    %1232 = vmatmul.f32.gmra.mxu0 %v857
    %v1233 = vpop.f32.mrf.mxu0
    %v1234 = vadd.f32 0.0, %v1233
    %1235 = vmatmul.f32.gmra.mxu0 %v860
    %v1236 = vpop.f32.mrf.mxu0
    %v1237 = vadd.f32 0.0, %v1236
    %1238 = vmatmul.f32.gmra.mxu0 %v863
    %v1239 = vpop.f32.mrf.mxu0
    %v1240 = vadd.f32 0.0, %v1239
    %1241 = vmatmul.f32.gmra.mxu0 %v866
    %v1242 = vpop.f32.mrf.mxu0
    %v1243 = vadd.f32 0.0, %v1242
    %1244 = vmatmul.f32.gmra.mxu0 %v869
    %v1245 = vpop.f32.mrf.mxu0
    %v1246 = vadd.f32 0.0, %v1245
    %1247 = vmatmul.f32.gmra.mxu0 %v872
    %v1248 = vpop.f32.mrf.mxu0
    %v1249 = vadd.f32 0.0, %v1248
    %1250 = vmatmul.f32.gmra.mxu0 %v875
    %v1251 = vpop.f32.mrf.mxu0
    %v1252 = vadd.f32 0.0, %v1251
    %1253 = vmatmul.f32.gmra.mxu0 %v878
    %v1254 = vpop.f32.mrf.mxu0
    %v1255 = vadd.f32 0.0, %v1254
    %1256 = vmatmul.f32.gmra.mxu0 %v881
    %v1257 = vpop.f32.mrf.mxu0
    %v1258 = vadd.f32 0.0, %v1257
    %1259 = vmatmul.f32.gmra.mxu0 %v884
    %v1260 = vpop.f32.mrf.mxu0
    %v1261 = vadd.f32 0.0, %v1260
    %1262 = vmatmul.f32.gmra.mxu0 %v887
    %v1263 = vpop.f32.mrf.mxu0
    %v1264 = vadd.f32 0.0, %v1263
    %1265 = vmatmul.f32.gmra.mxu0 %v890
    %v1266 = vpop.f32.mrf.mxu0
    %v1267 = vadd.f32 0.0, %v1266
    %1268 = vmatmul.f32.gmra.mxu0 %v893
    %v1269 = vpop.f32.mrf.mxu0
    %v1270 = vadd.f32 0.0, %v1269
    %1271 = vmatmul.f32.gmra.mxu0 %v896
    %v1272 = vpop.f32.mrf.mxu0
    %v1273 = vadd.f32 0.0, %v1272
    %1274 = vmatmul.f32.gmra.mxu0 %v899
    %v1275 = vpop.f32.mrf.mxu0
    %v1276 = vadd.f32 0.0, %v1275
    %1277 = vmatmul.f32.gmra.mxu0 %v902
    %v1278 = vpop.f32.mrf.mxu0
    %v1279 = vadd.f32 0.0, %v1278
    %1280 = vmatmul.f32.gmra.mxu0 %v905
    %v1281 = vpop.f32.mrf.mxu0
    %v1282 = vadd.f32 0.0, %v1281
    %1283 = vmatmul.f32.gmra.mxu0 %v908
    %v1284 = vpop.f32.mrf.mxu0
    %v1285 = vadd.f32 0.0, %v1284
    %1286 = vmatmul.f32.gmra.mxu0 %v911
    %v1287 = vpop.f32.mrf.mxu0
    %v1288 = vadd.f32 0.0, %v1287
    %1289 = vmatmul.f32.gmra.mxu0 %v914
    %v1290 = vpop.f32.mrf.mxu0
    %v1291 = vadd.f32 0.0, %v1290
    %1292 = vmatmul.f32.gmra.mxu0 %v917
    %v1293 = vpop.f32.mrf.mxu0
    %v1294 = vadd.f32 0.0, %v1293
    %1295 = vmatmul.f32.gmra.mxu0 %v920
    %v1296 = vpop.f32.mrf.mxu0
    %v1297 = vadd.f32 0.0, %v1296
    %1298 = vmatmul.f32.gmra.mxu0 %v923
    %v1299 = vpop.f32.mrf.mxu0
    %v1300 = vadd.f32 0.0, %v1299
    %1301 = vdwg.mxu0
    %1310 = vrot.lane.b32.xlu0 %v967, 64
    %v1311 = vpop.permute.xlu0 %1310
    %1312 = vrot.lane.b32.xlu0 %v970, 64
    %v1313 = vpop.permute.xlu0 %1312
    %1314 = vrot.lane.b32.xlu0 %v973, 64
    %v1315 = vpop.permute.xlu0 %1314
    %1316 = vrot.lane.b32.xlu0 %v976, 64
    %v1317 = vpop.permute.xlu0 %1316
    %1318 = vrot.lane.b32.xlu0 %v979, 64
    %v1319 = vpop.permute.xlu0 %1318
    %1320 = vrot.lane.b32.xlu0 %v982, 64
    %v1321 = vpop.permute.xlu0 %1320
    %1322 = vrot.lane.b32.xlu0 %v985, 64
    %v1323 = vpop.permute.xlu0 %1322
    %1324 = vrot.lane.b32.xlu0 %v988, 64
    %v1325 = vpop.permute.xlu0 %1324
    %1342 = vrot.lane.b32.xlu0 %v1015, 64
    %v1343 = vpop.permute.xlu0 %1342
    %1344 = vrot.lane.b32.xlu0 %v1018, 64
    %v1345 = vpop.permute.xlu0 %1344
    %1346 = vrot.lane.b32.xlu0 %v1021, 64
    %v1347 = vpop.permute.xlu0 %1346
    %1348 = vrot.lane.b32.xlu0 %v1024, 64
    %v1349 = vpop.permute.xlu0 %1348
    %1350 = vrot.lane.b32.xlu0 %v1027, 64
    %v1351 = vpop.permute.xlu0 %1350
    %1352 = vrot.lane.b32.xlu0 %v1030, 64
    %v1353 = vpop.permute.xlu0 %1352
    %1354 = vrot.lane.b32.xlu0 %v1033, 64
    %v1355 = vpop.permute.xlu0 %1354
    %1356 = vrot.lane.b32.xlu0 %v1036, 64
    %v1357 = vpop.permute.xlu0 %1356
    %1374 = vrot.lane.b32.xlu0 %v1063, 64
    %v1375 = vpop.permute.xlu0 %1374
    %1376 = vrot.lane.b32.xlu0 %v1066, 64
    %v1377 = vpop.permute.xlu0 %1376
    %1378 = vrot.lane.b32.xlu0 %v1069, 64
    %v1379 = vpop.permute.xlu0 %1378
    %1380 = vrot.lane.b32.xlu0 %v1072, 64
    %v1381 = vpop.permute.xlu0 %1380
    %1382 = vrot.lane.b32.xlu0 %v1075, 64
    %v1383 = vpop.permute.xlu0 %1382
    %1384 = vrot.lane.b32.xlu0 %v1078, 64
    %v1385 = vpop.permute.xlu0 %1384
    %1386 = vrot.lane.b32.xlu0 %v1081, 64
    %v1387 = vpop.permute.xlu0 %1386
    %1388 = vrot.lane.b32.xlu0 %v1084, 64
    %v1389 = vpop.permute.xlu0 %1388
    %1406 = vrot.lane.b32.xlu0 %v1111, 64
    %v1407 = vpop.permute.xlu0 %1406
    %1408 = vrot.lane.b32.xlu0 %v1114, 64
    %v1409 = vpop.permute.xlu0 %1408
    %1410 = vrot.lane.b32.xlu0 %v1117, 64
    %v1411 = vpop.permute.xlu0 %1410
    %1412 = vrot.lane.b32.xlu0 %v1120, 64
    %v1413 = vpop.permute.xlu0 %1412
    %1414 = vrot.lane.b32.xlu0 %v1123, 64
    %v1415 = vpop.permute.xlu0 %1414
    %1416 = vrot.lane.b32.xlu0 %v1126, 64
    %v1417 = vpop.permute.xlu0 %1416
    %1418 = vrot.lane.b32.xlu0 %v1129, 64
    %v1419 = vpop.permute.xlu0 %1418
    %1420 = vrot.lane.b32.xlu0 %v1132, 64
    %v1421 = vpop.permute.xlu0 %1420
    %1438 = vrot.lane.b32.xlu0 %v1159, 64
    %v1439 = vpop.permute.xlu0 %1438
    %1440 = vrot.lane.b32.xlu0 %v1162, 64
    %v1441 = vpop.permute.xlu0 %1440
    %1442 = vrot.lane.b32.xlu0 %v1165, 64
    %v1443 = vpop.permute.xlu0 %1442
    %1444 = vrot.lane.b32.xlu0 %v1168, 64
    %v1445 = vpop.permute.xlu0 %1444
    %1446 = vrot.lane.b32.xlu0 %v1171, 64
    %v1447 = vpop.permute.xlu0 %1446
    %1448 = vrot.lane.b32.xlu0 %v1174, 64
    %v1449 = vpop.permute.xlu0 %1448
    %1450 = vrot.lane.b32.xlu0 %v1177, 64
    %v1451 = vpop.permute.xlu0 %1450
    %1452 = vrot.lane.b32.xlu0 %v1180, 64
    %v1453 = vpop.permute.xlu0 %1452
    %1470 = vrot.lane.b32.xlu0 %v1207, 64
    %v1471 = vpop.permute.xlu0 %1470
    %1472 = vrot.lane.b32.xlu0 %v1210, 64
    %v1473 = vpop.permute.xlu0 %1472
    %1474 = vrot.lane.b32.xlu0 %v1213, 64
    %v1475 = vpop.permute.xlu0 %1474
    %1476 = vrot.lane.b32.xlu0 %v1216, 64
    %v1477 = vpop.permute.xlu0 %1476
    %1478 = vrot.lane.b32.xlu0 %v1219, 64
    %v1479 = vpop.permute.xlu0 %1478
    %1480 = vrot.lane.b32.xlu0 %v1222, 64
    %v1481 = vpop.permute.xlu0 %1480
    %1482 = vrot.lane.b32.xlu0 %v1225, 64
    %v1483 = vpop.permute.xlu0 %1482
    %1484 = vrot.lane.b32.xlu0 %v1228, 64
    %v1485 = vpop.permute.xlu0 %1484
    %1502 = vrot.lane.b32.xlu0 %v1255, 64
    %v1503 = vpop.permute.xlu0 %1502
    %1504 = vrot.lane.b32.xlu0 %v1258, 64
    %v1505 = vpop.permute.xlu0 %1504
    %1506 = vrot.lane.b32.xlu0 %v1261, 64
    %v1507 = vpop.permute.xlu0 %1506
    %1508 = vrot.lane.b32.xlu0 %v1264, 64
    %v1509 = vpop.permute.xlu0 %1508
    %1510 = vrot.lane.b32.xlu0 %v1267, 64
    %v1511 = vpop.permute.xlu0 %1510
    %1512 = vrot.lane.b32.xlu0 %v1270, 64
    %v1513 = vpop.permute.xlu0 %1512
    %1514 = vrot.lane.b32.xlu0 %v1273, 64
    %v1515 = vpop.permute.xlu0 %1514
    %1516 = vrot.lane.b32.xlu0 %v1276, 64
    %v1517 = vpop.permute.xlu0 %1516
    %v1526 = vsel %vm222, %v943, %v1311
    %v1527 = vsel %vm222, %v946, %v1313
    %v1528 = vsel %vm222, %v949, %v1315
    %v1529 = vsel %vm222, %v952, %v1317
    %v1530 = vsel %vm222, %v955, %v1319
    %v1531 = vsel %vm222, %v958, %v1321
    %v1532 = vsel %vm222, %v961, %v1323
    %v1533 = vsel %vm222, %v964, %v1325
    %v1534 = vsel %vm222, %v991, %v1343
    %v1535 = vsel %vm222, %v994, %v1345
    %v1536 = vsel %vm222, %v997, %v1347
    %v1537 = vsel %vm222, %v1000, %v1349
    %v1538 = vsel %vm222, %v1003, %v1351
    %v1539 = vsel %vm222, %v1006, %v1353
    %v1540 = vsel %vm222, %v1009, %v1355
    %v1541 = vsel %vm222, %v1012, %v1357
    %v1542 = vsel %vm222, %v1039, %v1375
    %v1543 = vsel %vm222, %v1042, %v1377
    %v1544 = vsel %vm222, %v1045, %v1379
    %v1545 = vsel %vm222, %v1048, %v1381
    %v1546 = vsel %vm222, %v1051, %v1383
    %v1547 = vsel %vm222, %v1054, %v1385
    %v1548 = vsel %vm222, %v1057, %v1387
    %v1549 = vsel %vm222, %v1060, %v1389
    %v1550 = vsel %vm222, %v1087, %v1407
    %v1551 = vsel %vm222, %v1090, %v1409
    %v1552 = vsel %vm222, %v1093, %v1411
    %v1553 = vsel %vm222, %v1096, %v1413
    %v1554 = vsel %vm222, %v1099, %v1415
    %v1555 = vsel %vm222, %v1102, %v1417
    %v1556 = vsel %vm222, %v1105, %v1419
    %v1557 = vsel %vm222, %v1108, %v1421
    %v1558 = vsel %vm222, %v1135, %v1439
    %v1559 = vsel %vm222, %v1138, %v1441
    %v1560 = vsel %vm222, %v1141, %v1443
    %v1561 = vsel %vm222, %v1144, %v1445
    %v1562 = vsel %vm222, %v1147, %v1447
    %v1563 = vsel %vm222, %v1150, %v1449
    %v1564 = vsel %vm222, %v1153, %v1451
    %v1565 = vsel %vm222, %v1156, %v1453
    %v1566 = vsel %vm222, %v1183, %v1471
    %v1567 = vsel %vm222, %v1186, %v1473
    %v1568 = vsel %vm222, %v1189, %v1475
    %v1569 = vsel %vm222, %v1192, %v1477
    %v1570 = vsel %vm222, %v1195, %v1479
    %v1571 = vsel %vm222, %v1198, %v1481
    %v1572 = vsel %vm222, %v1201, %v1483
    %v1573 = vsel %vm222, %v1204, %v1485
    %v1574 = vsel %vm222, %v1231, %v1503
    %v1575 = vsel %vm222, %v1234, %v1505
    %v1576 = vsel %vm222, %v1237, %v1507
    %v1577 = vsel %vm222, %v1240, %v1509
    %v1578 = vsel %vm222, %v1243, %v1511
    %v1579 = vsel %vm222, %v1246, %v1513
    %v1580 = vsel %vm222, %v1249, %v1515
    %v1581 = vsel %vm222, %v1252, %v1517
    %v1583 = vsel %vm222, %v156, 0
    %v1586 = vsel %vm222, %v157, 0
    %v1589 = vsel %vm222, %v158, 0
    %v1592 = vsel %vm222, %v159, 0
    %v1595 = vsel %vm222, %v160, 0
    %v1598 = vsel %vm222, %v161, 0
    %v1601 = vsel %vm222, %v162, 0
    %v1604 = vsel %vm222, %v163, 0
    %1606 = vmatpush.msra.mxu0 0.0
    %1607 = vmatpush.msra.mxu0 0.0
    %1608 = vmatpush.msra.mxu0 0.0
    %1609 = vmatpush.msra.mxu0 0.0
    %1610 = vmatpush.msra.mxu0 0.0
    %1611 = vmatpush.msra.mxu0 0.0
    %1612 = vmatpush.msra.mxu0 0.0
    %1613 = vmatpush.msra.mxu0 0.0
    %1614 = vmatpush.msra.mxu0 %v1533
    %1615 = vmatpush.msra.mxu0 %v1532
    %1616 = vmatpush.msra.mxu0 %v1531
    %1617 = vmatpush.msra.mxu0 %v1530
    %1618 = vmatpush.msra.mxu0 %v1529
    %1619 = vmatpush.msra.mxu0 %v1528
    %1620 = vmatpush.msra.mxu0 %v1527
    %1621 = vmatpush.msra.mxu0 %v1526
    %1622 = vmatmul.f32.gmra.mxu0 %v1583
    %v1623 = vpop.f32.mrf.mxu0
    %v1624 = vadd.f32 0.0, %v1623
    %1625 = vmatmul.f32.gmra.mxu0 %v1586
    %v1626 = vpop.f32.mrf.mxu0
    %v1627 = vadd.f32 0.0, %v1626
    %1628 = vmatmul.f32.gmra.mxu0 %v1589
    %v1629 = vpop.f32.mrf.mxu0
    %v1630 = vadd.f32 0.0, %v1629
    %1631 = vmatmul.f32.gmra.mxu0 %v1592
    %v1632 = vpop.f32.mrf.mxu0
    %v1633 = vadd.f32 0.0, %v1632
    %1634 = vmatmul.f32.gmra.mxu0 %v1595
    %v1635 = vpop.f32.mrf.mxu0
    %v1636 = vadd.f32 0.0, %v1635
    %1637 = vmatmul.f32.gmra.mxu0 %v1598
    %v1638 = vpop.f32.mrf.mxu0
    %v1639 = vadd.f32 0.0, %v1638
    %1640 = vmatmul.f32.gmra.mxu0 %v1601
    %v1641 = vpop.f32.mrf.mxu0
    %v1642 = vadd.f32 0.0, %v1641
    %1643 = vmatmul.f32.gmra.mxu0 %v1604
    %v1644 = vpop.f32.mrf.mxu0
    %v1645 = vadd.f32 0.0, %v1644
    %1646 = vdwg.mxu0
    %1647 = vmatpush.msra.mxu0 0.0
    %1648 = vmatpush.msra.mxu0 0.0
    %1649 = vmatpush.msra.mxu0 0.0
    %1650 = vmatpush.msra.mxu0 0.0
    %1651 = vmatpush.msra.mxu0 0.0
    %1652 = vmatpush.msra.mxu0 0.0
    %1653 = vmatpush.msra.mxu0 0.0
    %1654 = vmatpush.msra.mxu0 0.0
    %1655 = vmatpush.msra.mxu0 %v1541
    %1656 = vmatpush.msra.mxu0 %v1540
    %1657 = vmatpush.msra.mxu0 %v1539
    %1658 = vmatpush.msra.mxu0 %v1538
    %1659 = vmatpush.msra.mxu0 %v1537
    %1660 = vmatpush.msra.mxu0 %v1536
    %1661 = vmatpush.msra.mxu0 %v1535
    %1662 = vmatpush.msra.mxu0 %v1534
    %1663 = vmatmul.f32.gmra.mxu0 %v1583
    %v1664 = vpop.f32.mrf.mxu0
    %v1665 = vadd.f32 0.0, %v1664
    %1666 = vmatmul.f32.gmra.mxu0 %v1586
    %v1667 = vpop.f32.mrf.mxu0
    %v1668 = vadd.f32 0.0, %v1667
    %1669 = vmatmul.f32.gmra.mxu0 %v1589
    %v1670 = vpop.f32.mrf.mxu0
    %v1671 = vadd.f32 0.0, %v1670
    %1672 = vmatmul.f32.gmra.mxu0 %v1592
    %v1673 = vpop.f32.mrf.mxu0
    %v1674 = vadd.f32 0.0, %v1673
    %1675 = vmatmul.f32.gmra.mxu0 %v1595
    %v1676 = vpop.f32.mrf.mxu0
    %v1677 = vadd.f32 0.0, %v1676
    %1678 = vmatmul.f32.gmra.mxu0 %v1598
    %v1679 = vpop.f32.mrf.mxu0
    %v1680 = vadd.f32 0.0, %v1679
    %1681 = vmatmul.f32.gmra.mxu0 %v1601
    %v1682 = vpop.f32.mrf.mxu0
    %v1683 = vadd.f32 0.0, %v1682
    %1684 = vmatmul.f32.gmra.mxu0 %v1604
    %v1685 = vpop.f32.mrf.mxu0
    %v1686 = vadd.f32 0.0, %v1685
    %1687 = vdwg.mxu0
    %1688 = vmatpush.msra.mxu0 0.0
    %1689 = vmatpush.msra.mxu0 0.0
    %1690 = vmatpush.msra.mxu0 0.0
    %1691 = vmatpush.msra.mxu0 0.0
    %1692 = vmatpush.msra.mxu0 0.0
    %1693 = vmatpush.msra.mxu0 0.0
    %1694 = vmatpush.msra.mxu0 0.0
    %1695 = vmatpush.msra.mxu0 0.0
    %1696 = vmatpush.msra.mxu0 %v1549
    %1697 = vmatpush.msra.mxu0 %v1548
    %1698 = vmatpush.msra.mxu0 %v1547
    %1699 = vmatpush.msra.mxu0 %v1546
    %1700 = vmatpush.msra.mxu0 %v1545
    %1701 = vmatpush.msra.mxu0 %v1544
    %1702 = vmatpush.msra.mxu0 %v1543
    %1703 = vmatpush.msra.mxu0 %v1542
    %1704 = vmatmul.f32.gmra.mxu0 %v1583
    %v1705 = vpop.f32.mrf.mxu0
    %v1706 = vadd.f32 0.0, %v1705
    %1707 = vmatmul.f32.gmra.mxu0 %v1586
    %v1708 = vpop.f32.mrf.mxu0
    %v1709 = vadd.f32 0.0, %v1708
    %1710 = vmatmul.f32.gmra.mxu0 %v1589
    %v1711 = vpop.f32.mrf.mxu0
    %v1712 = vadd.f32 0.0, %v1711
    %1713 = vmatmul.f32.gmra.mxu0 %v1592
    %v1714 = vpop.f32.mrf.mxu0
    %v1715 = vadd.f32 0.0, %v1714
    %1716 = vmatmul.f32.gmra.mxu0 %v1595
    %v1717 = vpop.f32.mrf.mxu0
    %v1718 = vadd.f32 0.0, %v1717
    %1719 = vmatmul.f32.gmra.mxu0 %v1598
    %v1720 = vpop.f32.mrf.mxu0
    %v1721 = vadd.f32 0.0, %v1720
    %1722 = vmatmul.f32.gmra.mxu0 %v1601
    %v1723 = vpop.f32.mrf.mxu0
    %v1724 = vadd.f32 0.0, %v1723
    %1725 = vmatmul.f32.gmra.mxu0 %v1604
    %v1726 = vpop.f32.mrf.mxu0
    %v1727 = vadd.f32 0.0, %v1726
    %1728 = vdwg.mxu0
    %1729 = vmatpush.msra.mxu0 0.0
    %1730 = vmatpush.msra.mxu0 0.0
    %1731 = vmatpush.msra.mxu0 0.0
    %1732 = vmatpush.msra.mxu0 0.0
    %1733 = vmatpush.msra.mxu0 0.0
    %1734 = vmatpush.msra.mxu0 0.0
    %1735 = vmatpush.msra.mxu0 0.0
    %1736 = vmatpush.msra.mxu0 0.0
    %1737 = vmatpush.msra.mxu0 %v1557
    %1738 = vmatpush.msra.mxu0 %v1556
    %1739 = vmatpush.msra.mxu0 %v1555
    %1740 = vmatpush.msra.mxu0 %v1554
    %1741 = vmatpush.msra.mxu0 %v1553
    %1742 = vmatpush.msra.mxu0 %v1552
    %1743 = vmatpush.msra.mxu0 %v1551
    %1744 = vmatpush.msra.mxu0 %v1550
    %1745 = vmatmul.f32.gmra.mxu0 %v1583
    %v1746 = vpop.f32.mrf.mxu0
    %v1747 = vadd.f32 0.0, %v1746
    %1748 = vmatmul.f32.gmra.mxu0 %v1586
    %v1749 = vpop.f32.mrf.mxu0
    %v1750 = vadd.f32 0.0, %v1749
    %1751 = vmatmul.f32.gmra.mxu0 %v1589
    %v1752 = vpop.f32.mrf.mxu0
    %v1753 = vadd.f32 0.0, %v1752
    %1754 = vmatmul.f32.gmra.mxu0 %v1592
    %v1755 = vpop.f32.mrf.mxu0
    %v1756 = vadd.f32 0.0, %v1755
    %1757 = vmatmul.f32.gmra.mxu0 %v1595
    %v1758 = vpop.f32.mrf.mxu0
    %v1759 = vadd.f32 0.0, %v1758
    %1760 = vmatmul.f32.gmra.mxu0 %v1598
    %v1761 = vpop.f32.mrf.mxu0
    %v1762 = vadd.f32 0.0, %v1761
    %1763 = vmatmul.f32.gmra.mxu0 %v1601
    %v1764 = vpop.f32.mrf.mxu0
    %v1765 = vadd.f32 0.0, %v1764
    %1766 = vmatmul.f32.gmra.mxu0 %v1604
    %v1767 = vpop.f32.mrf.mxu0
    %v1768 = vadd.f32 0.0, %v1767
    %1769 = vdwg.mxu0
    %1770 = vmatpush.msra.mxu0 0.0
    %1771 = vmatpush.msra.mxu0 0.0
    %1772 = vmatpush.msra.mxu0 0.0
    %1773 = vmatpush.msra.mxu0 0.0
    %1774 = vmatpush.msra.mxu0 0.0
    %1775 = vmatpush.msra.mxu0 0.0
    %1776 = vmatpush.msra.mxu0 0.0
    %1777 = vmatpush.msra.mxu0 0.0
    %1778 = vmatpush.msra.mxu0 %v1565
    %1779 = vmatpush.msra.mxu0 %v1564
    %1780 = vmatpush.msra.mxu0 %v1563
    %1781 = vmatpush.msra.mxu0 %v1562
    %1782 = vmatpush.msra.mxu0 %v1561
    %1783 = vmatpush.msra.mxu0 %v1560
    %1784 = vmatpush.msra.mxu0 %v1559
    %1785 = vmatpush.msra.mxu0 %v1558
    %1786 = vmatmul.f32.gmra.mxu0 %v1583
    %v1787 = vpop.f32.mrf.mxu0
    %v1788 = vadd.f32 0.0, %v1787
    %1789 = vmatmul.f32.gmra.mxu0 %v1586
    %v1790 = vpop.f32.mrf.mxu0
    %v1791 = vadd.f32 0.0, %v1790
    %1792 = vmatmul.f32.gmra.mxu0 %v1589
    %v1793 = vpop.f32.mrf.mxu0
    %v1794 = vadd.f32 0.0, %v1793
    %1795 = vmatmul.f32.gmra.mxu0 %v1592
    %v1796 = vpop.f32.mrf.mxu0
    %v1797 = vadd.f32 0.0, %v1796
    %1798 = vmatmul.f32.gmra.mxu0 %v1595
    %v1799 = vpop.f32.mrf.mxu0
    %v1800 = vadd.f32 0.0, %v1799
    %1801 = vmatmul.f32.gmra.mxu0 %v1598
    %v1802 = vpop.f32.mrf.mxu0
    %v1803 = vadd.f32 0.0, %v1802
    %1804 = vmatmul.f32.gmra.mxu0 %v1601
    %v1805 = vpop.f32.mrf.mxu0
    %v1806 = vadd.f32 0.0, %v1805
    %1807 = vmatmul.f32.gmra.mxu0 %v1604
    %v1808 = vpop.f32.mrf.mxu0
    %v1809 = vadd.f32 0.0, %v1808
    %1810 = vdwg.mxu0
    %1811 = vmatpush.msra.mxu0 0.0
    %1812 = vmatpush.msra.mxu0 0.0
    %1813 = vmatpush.msra.mxu0 0.0
    %1814 = vmatpush.msra.mxu0 0.0
    %1815 = vmatpush.msra.mxu0 0.0
    %1816 = vmatpush.msra.mxu0 0.0
    %1817 = vmatpush.msra.mxu0 0.0
    %1818 = vmatpush.msra.mxu0 0.0
    %1819 = vmatpush.msra.mxu0 %v1573
    %1820 = vmatpush.msra.mxu0 %v1572
    %1821 = vmatpush.msra.mxu0 %v1571
    %1822 = vmatpush.msra.mxu0 %v1570
    %1823 = vmatpush.msra.mxu0 %v1569
    %1824 = vmatpush.msra.mxu0 %v1568
    %1825 = vmatpush.msra.mxu0 %v1567
    %1826 = vmatpush.msra.mxu0 %v1566
    %1827 = vmatmul.f32.gmra.mxu0 %v1583
    %v1828 = vpop.f32.mrf.mxu0
    %v1829 = vadd.f32 0.0, %v1828
    %1830 = vmatmul.f32.gmra.mxu0 %v1586
    %v1831 = vpop.f32.mrf.mxu0
    %v1832 = vadd.f32 0.0, %v1831
    %1833 = vmatmul.f32.gmra.mxu0 %v1589
    %v1834 = vpop.f32.mrf.mxu0
    %v1835 = vadd.f32 0.0, %v1834
    %1836 = vmatmul.f32.gmra.mxu0 %v1592
    %v1837 = vpop.f32.mrf.mxu0
    %v1838 = vadd.f32 0.0, %v1837
    %1839 = vmatmul.f32.gmra.mxu0 %v1595
    %v1840 = vpop.f32.mrf.mxu0
    %v1841 = vadd.f32 0.0, %v1840
    %1842 = vmatmul.f32.gmra.mxu0 %v1598
    %v1843 = vpop.f32.mrf.mxu0
    %v1844 = vadd.f32 0.0, %v1843
    %1845 = vmatmul.f32.gmra.mxu0 %v1601
    %v1846 = vpop.f32.mrf.mxu0
    %v1847 = vadd.f32 0.0, %v1846
    %1848 = vmatmul.f32.gmra.mxu0 %v1604
    %v1849 = vpop.f32.mrf.mxu0
    %v1850 = vadd.f32 0.0, %v1849
    %1851 = vdwg.mxu0
    %1852 = vmatpush.msra.mxu0 0.0
    %1853 = vmatpush.msra.mxu0 0.0
    %1854 = vmatpush.msra.mxu0 0.0
    %1855 = vmatpush.msra.mxu0 0.0
    %1856 = vmatpush.msra.mxu0 0.0
    %1857 = vmatpush.msra.mxu0 0.0
    %1858 = vmatpush.msra.mxu0 0.0
    %1859 = vmatpush.msra.mxu0 0.0
    %1860 = vmatpush.msra.mxu0 %v1581
    %1861 = vmatpush.msra.mxu0 %v1580
    %1862 = vmatpush.msra.mxu0 %v1579
    %1863 = vmatpush.msra.mxu0 %v1578
    %1864 = vmatpush.msra.mxu0 %v1577
    %1865 = vmatpush.msra.mxu0 %v1576
    %1866 = vmatpush.msra.mxu0 %v1575
    %1867 = vmatpush.msra.mxu0 %v1574
    %1868 = vmatmul.f32.gmra.mxu0 %v1583
    %v1869 = vpop.f32.mrf.mxu0
    %v1870 = vadd.f32 0.0, %v1869
    %1871 = vmatmul.f32.gmra.mxu0 %v1586
    %v1872 = vpop.f32.mrf.mxu0
    %v1873 = vadd.f32 0.0, %v1872
    %1874 = vmatmul.f32.gmra.mxu0 %v1589
    %v1875 = vpop.f32.mrf.mxu0
    %v1876 = vadd.f32 0.0, %v1875
    %1877 = vmatmul.f32.gmra.mxu0 %v1592
    %v1878 = vpop.f32.mrf.mxu0
    %v1879 = vadd.f32 0.0, %v1878
    %1880 = vmatmul.f32.gmra.mxu0 %v1595
    %v1881 = vpop.f32.mrf.mxu0
    %v1882 = vadd.f32 0.0, %v1881
    %1883 = vmatmul.f32.gmra.mxu0 %v1598
    %v1884 = vpop.f32.mrf.mxu0
    %v1885 = vadd.f32 0.0, %v1884
    %1886 = vmatmul.f32.gmra.mxu0 %v1601
    %v1887 = vpop.f32.mrf.mxu0
    %v1888 = vadd.f32 0.0, %v1887
    %1889 = vmatmul.f32.gmra.mxu0 %v1604
    %v1890 = vpop.f32.mrf.mxu0
    %v1891 = vadd.f32 0.0, %v1890
    %1892 = vdwg.mxu0
    %1893 = vmatpush.msra.mxu0 0.0
    %1894 = vmatpush.msra.mxu0 0.0
    %1895 = vmatpush.msra.mxu0 0.0
    %1896 = vmatpush.msra.mxu0 0.0
    %1897 = vmatpush.msra.mxu0 0.0
    %1898 = vmatpush.msra.mxu0 0.0
    %1899 = vmatpush.msra.mxu0 0.0
    %1900 = vmatpush.msra.mxu0 0.0
    %1901 = vmatpush.msra.mxu0 %v1300
    %1902 = vmatpush.msra.mxu0 %v1297
    %1903 = vmatpush.msra.mxu0 %v1294
    %1904 = vmatpush.msra.mxu0 %v1291
    %1905 = vmatpush.msra.mxu0 %v1288
    %1906 = vmatpush.msra.mxu0 %v1285
    %1907 = vmatpush.msra.mxu0 %v1282
    %1908 = vmatpush.msra.mxu0 %v1279
    %1909 = vmatmul.f32.gmra.mxu0 %v1583
    %v1910 = vpop.f32.mrf.mxu0
    %v1911 = vadd.f32 0.0, %v1910
    %1912 = vmatmul.f32.gmra.mxu0 %v1586
    %v1913 = vpop.f32.mrf.mxu0
    %v1914 = vadd.f32 0.0, %v1913
    %1915 = vmatmul.f32.gmra.mxu0 %v1589
    %v1916 = vpop.f32.mrf.mxu0
    %v1917 = vadd.f32 0.0, %v1916
    %1918 = vmatmul.f32.gmra.mxu0 %v1592
    %v1919 = vpop.f32.mrf.mxu0
    %v1920 = vadd.f32 0.0, %v1919
    %1921 = vmatmul.f32.gmra.mxu0 %v1595
    %v1922 = vpop.f32.mrf.mxu0
    %v1923 = vadd.f32 0.0, %v1922
    %1924 = vmatmul.f32.gmra.mxu0 %v1598
    %v1925 = vpop.f32.mrf.mxu0
    %v1926 = vadd.f32 0.0, %v1925
    %1927 = vmatmul.f32.gmra.mxu0 %v1601
    %v1928 = vpop.f32.mrf.mxu0
    %v1929 = vadd.f32 0.0, %v1928
    %1930 = vmatmul.f32.gmra.mxu0 %v1604
    %v1931 = vpop.f32.mrf.mxu0
    %v1932 = vadd.f32 0.0, %v1931
    %1933 = vdwg.mxu0
    %v1934 = vmul.f32 %v1624, %v1624
    %v1935 = vmul.f32 %v1665, %v1665
    %v1936 = vmul.f32 %v1627, %v1627
    %v1937 = vmul.f32 %v1668, %v1668
    %v1938 = vmul.f32 %v1630, %v1630
    %v1939 = vmul.f32 %v1671, %v1671
    %v1940 = vmul.f32 %v1633, %v1633
    %v1941 = vmul.f32 %v1674, %v1674
    %v1942 = vmul.f32 %v1636, %v1636
    %v1943 = vmul.f32 %v1677, %v1677
    %v1944 = vmul.f32 %v1639, %v1639
    %v1945 = vmul.f32 %v1680, %v1680
    %v1946 = vmul.f32 %v1642, %v1642
    %v1947 = vmul.f32 %v1683, %v1683
    %v1948 = vmul.f32 %v1645, %v1645
    %v1949 = vmul.f32 %v1686, %v1686
    %v1950 = vmul.f32 %v1706, %v1706
    %v1951 = vmul.f32 %v1709, %v1709
    %v1952 = vmul.f32 %v1712, %v1712
    %v1953 = vmul.f32 %v1715, %v1715
    %v1954 = vmul.f32 %v1718, %v1718
    %v1955 = vmul.f32 %v1721, %v1721
    %v1956 = vmul.f32 %v1724, %v1724
    %v1957 = vmul.f32 %v1727, %v1727
    %1974 = vrot.lane.b32.xlu0 %v1665, 64
    %v1975 = vpop.permute.xlu0 %1974
    %1976 = vrot.lane.b32.xlu0 %v1706, 64
    %v1977 = vpop.permute.xlu0 %1976
    %1978 = vrot.lane.b32.xlu0 %v1668, 64
    %v1979 = vpop.permute.xlu0 %1978
    %1980 = vrot.lane.b32.xlu0 %v1709, 64
    %v1981 = vpop.permute.xlu0 %1980
    %1982 = vrot.lane.b32.xlu0 %v1671, 64
    %v1983 = vpop.permute.xlu0 %1982
    %1984 = vrot.lane.b32.xlu0 %v1712, 64
    %v1985 = vpop.permute.xlu0 %1984
    %1986 = vrot.lane.b32.xlu0 %v1674, 64
    %v1987 = vpop.permute.xlu0 %1986
    %1988 = vrot.lane.b32.xlu0 %v1715, 64
    %v1989 = vpop.permute.xlu0 %1988
    %1990 = vrot.lane.b32.xlu0 %v1677, 64
    %v1991 = vpop.permute.xlu0 %1990
    %1992 = vrot.lane.b32.xlu0 %v1718, 64
    %v1993 = vpop.permute.xlu0 %1992
    %1994 = vrot.lane.b32.xlu0 %v1680, 64
    %v1995 = vpop.permute.xlu0 %1994
    %1996 = vrot.lane.b32.xlu0 %v1721, 64
    %v1997 = vpop.permute.xlu0 %1996
    %1998 = vrot.lane.b32.xlu0 %v1683, 64
    %v1999 = vpop.permute.xlu0 %1998
    %2000 = vrot.lane.b32.xlu0 %v1724, 64
    %v2001 = vpop.permute.xlu0 %2000
    %2002 = vrot.lane.b32.xlu0 %v1686, 64
    %v2003 = vpop.permute.xlu0 %2002
    %2004 = vrot.lane.b32.xlu0 %v1727, 64
    %v2005 = vpop.permute.xlu0 %2004
    %v2006 = vsel %vm222, %v1975, %v1977
    %v2007 = vsel %vm222, %v1979, %v1981
    %v2008 = vsel %vm222, %v1983, %v1985
    %v2009 = vsel %vm222, %v1987, %v1989
    %v2010 = vsel %vm222, %v1991, %v1993
    %v2011 = vsel %vm222, %v1995, %v1997
    %v2012 = vsel %vm222, %v1999, %v2001
    %v2013 = vsel %vm222, %v2003, %v2005
    %v2030 = vmul.f32 %v1624, %v2006
    %v2031 = vmul.f32 %v1665, %v1977
    %v2032 = vmul.f32 %v1627, %v2007
    %v2033 = vmul.f32 %v1668, %v1981
    %v2034 = vmul.f32 %v1630, %v2008
    %v2035 = vmul.f32 %v1671, %v1985
    %v2036 = vmul.f32 %v1633, %v2009
    %v2037 = vmul.f32 %v1674, %v1989
    %v2038 = vmul.f32 %v1636, %v2010
    %v2039 = vmul.f32 %v1677, %v1993
    %v2040 = vmul.f32 %v1639, %v2011
    %v2041 = vmul.f32 %v1680, %v1997
    %v2042 = vmul.f32 %v1642, %v2012
    %v2043 = vmul.f32 %v1683, %v2001
    %v2044 = vmul.f32 %v1645, %v2013
    %v2045 = vmul.f32 %v1686, %v2005
    %v2046 = vsub.f32 %v1747, %v1934
    %v2047 = vsub.f32 %v1788, %v1935
    %v2048 = vsub.f32 %v1750, %v1936
    %v2049 = vsub.f32 %v1791, %v1937
    %v2050 = vsub.f32 %v1753, %v1938
    %v2051 = vsub.f32 %v1794, %v1939
    %v2052 = vsub.f32 %v1756, %v1940
    %v2053 = vsub.f32 %v1797, %v1941
    %v2054 = vsub.f32 %v1759, %v1942
    %v2055 = vsub.f32 %v1800, %v1943
    %v2056 = vsub.f32 %v1762, %v1944
    %v2057 = vsub.f32 %v1803, %v1945
    %v2058 = vsub.f32 %v1765, %v1946
    %v2059 = vsub.f32 %v1806, %v1947
    %v2060 = vsub.f32 %v1768, %v1948
    %v2061 = vsub.f32 %v1809, %v1949
    %v2062 = vsub.f32 %v1829, %v1950
    %v2063 = vsub.f32 %v1832, %v1951
    %v2064 = vsub.f32 %v1835, %v1952
    %v2065 = vsub.f32 %v1838, %v1953
    %v2066 = vsub.f32 %v1841, %v1954
    %v2067 = vsub.f32 %v1844, %v1955
    %v2068 = vsub.f32 %v1847, %v1956
    %v2069 = vsub.f32 %v1850, %v1957
    %v2070 = vsub.f32 %v1870, %v2030
    %v2071 = vsub.f32 %v1911, %v2031
    %v2072 = vsub.f32 %v1873, %v2032
    %v2073 = vsub.f32 %v1914, %v2033
    %v2074 = vsub.f32 %v1876, %v2034
    %v2075 = vsub.f32 %v1917, %v2035
    %v2076 = vsub.f32 %v1879, %v2036
    %v2077 = vsub.f32 %v1920, %v2037
    %v2078 = vsub.f32 %v1882, %v2038
    %v2079 = vsub.f32 %v1923, %v2039
    %v2080 = vsub.f32 %v1885, %v2040
    %v2081 = vsub.f32 %v1926, %v2041
    %v2082 = vsub.f32 %v1888, %v2042
    %v2083 = vsub.f32 %v1929, %v2043
    %v2084 = vsub.f32 %v1891, %v2044
    %v2085 = vsub.f32 %v1932, %v2045
    %v2086 = vmul.f32 %v2030, 2.0
    %v2087 = vmul.f32 %v2031, 2.0
    %v2088 = vmul.f32 %v2032, 2.0
    %v2089 = vmul.f32 %v2033, 2.0
    %v2090 = vmul.f32 %v2034, 2.0
    %v2091 = vmul.f32 %v2035, 2.0
    %v2092 = vmul.f32 %v2036, 2.0
    %v2093 = vmul.f32 %v2037, 2.0
    %v2094 = vmul.f32 %v2038, 2.0
    %v2095 = vmul.f32 %v2039, 2.0
    %v2096 = vmul.f32 %v2040, 2.0
    %v2097 = vmul.f32 %v2041, 2.0
    %v2098 = vmul.f32 %v2042, 2.0
    %v2099 = vmul.f32 %v2043, 2.0
    %v2100 = vmul.f32 %v2044, 2.0
    %v2101 = vmul.f32 %v2045, 2.0
    %v2102 = vadd.f32 %v2086, 0.0001
    %v2103 = vadd.f32 %v2087, 0.0001
    %v2104 = vadd.f32 %v2088, 0.0001
    %v2105 = vadd.f32 %v2089, 0.0001
    %v2106 = vadd.f32 %v2090, 0.0001
    %v2107 = vadd.f32 %v2091, 0.0001
    %v2108 = vadd.f32 %v2092, 0.0001
    %v2109 = vadd.f32 %v2093, 0.0001
    %v2110 = vadd.f32 %v2094, 0.0001
    %v2111 = vadd.f32 %v2095, 0.0001
    %v2112 = vadd.f32 %v2096, 0.0001
    %v2113 = vadd.f32 %v2097, 0.0001
    %v2114 = vadd.f32 %v2098, 0.0001
    %v2115 = vadd.f32 %v2099, 0.0001
    %v2116 = vadd.f32 %v2100, 0.0001
    %v2117 = vadd.f32 %v2101, 0.0001
    %v2118 = vmul.f32 %v2070, 2.0
    %v2119 = vmul.f32 %v2071, 2.0
    %v2120 = vmul.f32 %v2072, 2.0
    %v2121 = vmul.f32 %v2073, 2.0
    %v2122 = vmul.f32 %v2074, 2.0
    %v2123 = vmul.f32 %v2075, 2.0
    %v2124 = vmul.f32 %v2076, 2.0
    %v2125 = vmul.f32 %v2077, 2.0
    %v2126 = vmul.f32 %v2078, 2.0
    %v2127 = vmul.f32 %v2079, 2.0
    %v2128 = vmul.f32 %v2080, 2.0
    %v2129 = vmul.f32 %v2081, 2.0
    %v2130 = vmul.f32 %v2082, 2.0
    %v2131 = vmul.f32 %v2083, 2.0
    %v2132 = vmul.f32 %v2084, 2.0
    %v2133 = vmul.f32 %v2085, 2.0
    %v2134 = vadd.f32 %v2118, 0.0009
    %v2135 = vadd.f32 %v2119, 0.0009
    %v2136 = vadd.f32 %v2120, 0.0009
    %v2137 = vadd.f32 %v2121, 0.0009
    %v2138 = vadd.f32 %v2122, 0.0009
    %v2139 = vadd.f32 %v2123, 0.0009
    %v2140 = vadd.f32 %v2124, 0.0009
    %v2141 = vadd.f32 %v2125, 0.0009
    %v2142 = vadd.f32 %v2126, 0.0009
    %v2143 = vadd.f32 %v2127, 0.0009
    %v2144 = vadd.f32 %v2128, 0.0009
    %v2145 = vadd.f32 %v2129, 0.0009
    %v2146 = vadd.f32 %v2130, 0.0009
    %v2147 = vadd.f32 %v2131, 0.0009
    %v2148 = vadd.f32 %v2132, 0.0009
    %v2149 = vadd.f32 %v2133, 0.0009
    %v2150 = vmul.f32 %v2102, %v2134
    %v2151 = vmul.f32 %v2103, %v2135
    %v2152 = vmul.f32 %v2104, %v2136
    %v2153 = vmul.f32 %v2105, %v2137
    %v2154 = vmul.f32 %v2106, %v2138
    %v2155 = vmul.f32 %v2107, %v2139
    %v2156 = vmul.f32 %v2108, %v2140
    %v2157 = vmul.f32 %v2109, %v2141
    %v2158 = vmul.f32 %v2110, %v2142
    %v2159 = vmul.f32 %v2111, %v2143
    %v2160 = vmul.f32 %v2112, %v2144
    %v2161 = vmul.f32 %v2113, %v2145
    %v2162 = vmul.f32 %v2114, %v2146
    %v2163 = vmul.f32 %v2115, %v2147
    %v2164 = vmul.f32 %v2116, %v2148
    %v2165 = vmul.f32 %v2117, %v2149
    %2182 = vrot.lane.b32.xlu0 %v1935, 64
    %v2183 = vpop.permute.xlu0 %2182
    %2184 = vrot.lane.b32.xlu0 %v1950, 64
    %v2185 = vpop.permute.xlu0 %2184
    %2186 = vrot.lane.b32.xlu0 %v1937, 64
    %v2187 = vpop.permute.xlu0 %2186
    %2188 = vrot.lane.b32.xlu0 %v1951, 64
    %v2189 = vpop.permute.xlu0 %2188
    %2190 = vrot.lane.b32.xlu0 %v1939, 64
    %v2191 = vpop.permute.xlu0 %2190
    %2192 = vrot.lane.b32.xlu0 %v1952, 64
    %v2193 = vpop.permute.xlu0 %2192
    %2194 = vrot.lane.b32.xlu0 %v1941, 64
    %v2195 = vpop.permute.xlu0 %2194
    %2196 = vrot.lane.b32.xlu0 %v1953, 64
    %v2197 = vpop.permute.xlu0 %2196
    %2198 = vrot.lane.b32.xlu0 %v1943, 64
    %v2199 = vpop.permute.xlu0 %2198
    %2200 = vrot.lane.b32.xlu0 %v1954, 64
    %v2201 = vpop.permute.xlu0 %2200
    %2202 = vrot.lane.b32.xlu0 %v1945, 64
    %v2203 = vpop.permute.xlu0 %2202
    %2204 = vrot.lane.b32.xlu0 %v1955, 64
    %v2205 = vpop.permute.xlu0 %2204
    %2206 = vrot.lane.b32.xlu0 %v1947, 64
    %v2207 = vpop.permute.xlu0 %2206
    %2208 = vrot.lane.b32.xlu0 %v1956, 64
    %v2209 = vpop.permute.xlu0 %2208
    %2210 = vrot.lane.b32.xlu0 %v1949, 64
    %v2211 = vpop.permute.xlu0 %2210
    %2212 = vrot.lane.b32.xlu0 %v1957, 64
    %v2213 = vpop.permute.xlu0 %2212
    %v2214 = vsel %vm222, %v2183, %v2185
    %v2215 = vsel %vm222, %v2187, %v2189
    %v2216 = vsel %vm222, %v2191, %v2193
    %v2217 = vsel %vm222, %v2195, %v2197
    %v2218 = vsel %vm222, %v2199, %v2201
    %v2219 = vsel %vm222, %v2203, %v2205
    %v2220 = vsel %vm222, %v2207, %v2209
    %v2221 = vsel %vm222, %v2211, %v2213
    %v2238 = vadd.f32 %v1934, %v2214
    %v2239 = vadd.f32 %v1935, %v2185
    %v2240 = vadd.f32 %v1936, %v2215
    %v2241 = vadd.f32 %v1937, %v2189
    %v2242 = vadd.f32 %v1938, %v2216
    %v2243 = vadd.f32 %v1939, %v2193
    %v2244 = vadd.f32 %v1940, %v2217
    %v2245 = vadd.f32 %v1941, %v2197
    %v2246 = vadd.f32 %v1942, %v2218
    %v2247 = vadd.f32 %v1943, %v2201
    %v2248 = vadd.f32 %v1944, %v2219
    %v2249 = vadd.f32 %v1945, %v2205
    %v2250 = vadd.f32 %v1946, %v2220
    %v2251 = vadd.f32 %v1947, %v2209
    %v2252 = vadd.f32 %v1948, %v2221
    %v2253 = vadd.f32 %v1949, %v2213
    %v2254 = vadd.f32 %v2238, 0.0001
    %v2255 = vadd.f32 %v2239, 0.0001
    %v2256 = vadd.f32 %v2240, 0.0001
    %v2257 = vadd.f32 %v2241, 0.0001
    %v2258 = vadd.f32 %v2242, 0.0001
    %v2259 = vadd.f32 %v2243, 0.0001
    %v2260 = vadd.f32 %v2244, 0.0001
    %v2261 = vadd.f32 %v2245, 0.0001
    %v2262 = vadd.f32 %v2246, 0.0001
    %v2263 = vadd.f32 %v2247, 0.0001
    %v2264 = vadd.f32 %v2248, 0.0001
    %v2265 = vadd.f32 %v2249, 0.0001
    %v2266 = vadd.f32 %v2250, 0.0001
    %v2267 = vadd.f32 %v2251, 0.0001
    %v2268 = vadd.f32 %v2252, 0.0001
    %v2269 = vadd.f32 %v2253, 0.0001
    %2286 = vrot.lane.b32.xlu0 %v2047, 64
    %v2287 = vpop.permute.xlu0 %2286
    %2288 = vrot.lane.b32.xlu0 %v2062, 64
    %v2289 = vpop.permute.xlu0 %2288
    %2290 = vrot.lane.b32.xlu0 %v2049, 64
    %v2291 = vpop.permute.xlu0 %2290
    %2292 = vrot.lane.b32.xlu0 %v2063, 64
    %v2293 = vpop.permute.xlu0 %2292
    %2294 = vrot.lane.b32.xlu0 %v2051, 64
    %v2295 = vpop.permute.xlu0 %2294
    %2296 = vrot.lane.b32.xlu0 %v2064, 64
    %v2297 = vpop.permute.xlu0 %2296
    %2298 = vrot.lane.b32.xlu0 %v2053, 64
    %v2299 = vpop.permute.xlu0 %2298
    %2300 = vrot.lane.b32.xlu0 %v2065, 64
    %v2301 = vpop.permute.xlu0 %2300
    %2302 = vrot.lane.b32.xlu0 %v2055, 64
    %v2303 = vpop.permute.xlu0 %2302
    %2304 = vrot.lane.b32.xlu0 %v2066, 64
    %v2305 = vpop.permute.xlu0 %2304
    %2306 = vrot.lane.b32.xlu0 %v2057, 64
    %v2307 = vpop.permute.xlu0 %2306
    %2308 = vrot.lane.b32.xlu0 %v2067, 64
    %v2309 = vpop.permute.xlu0 %2308
    %2310 = vrot.lane.b32.xlu0 %v2059, 64
    %v2311 = vpop.permute.xlu0 %2310
    %2312 = vrot.lane.b32.xlu0 %v2068, 64
    %v2313 = vpop.permute.xlu0 %2312
    %2314 = vrot.lane.b32.xlu0 %v2061, 64
    %v2315 = vpop.permute.xlu0 %2314
    %2316 = vrot.lane.b32.xlu0 %v2069, 64
    %v2317 = vpop.permute.xlu0 %2316
    %v2318 = vsel %vm222, %v2287, %v2289
    %v2319 = vsel %vm222, %v2291, %v2293
    %v2320 = vsel %vm222, %v2295, %v2297
    %v2321 = vsel %vm222, %v2299, %v2301
    %v2322 = vsel %vm222, %v2303, %v2305
    %v2323 = vsel %vm222, %v2307, %v2309
    %v2324 = vsel %vm222, %v2311, %v2313
    %v2325 = vsel %vm222, %v2315, %v2317
    %v2342 = vadd.f32 %v2046, %v2318
    %v2343 = vadd.f32 %v2047, %v2289
    %v2344 = vadd.f32 %v2048, %v2319
    %v2345 = vadd.f32 %v2049, %v2293
    %v2346 = vadd.f32 %v2050, %v2320
    %v2347 = vadd.f32 %v2051, %v2297
    %v2348 = vadd.f32 %v2052, %v2321
    %v2349 = vadd.f32 %v2053, %v2301
    %v2350 = vadd.f32 %v2054, %v2322
    %v2351 = vadd.f32 %v2055, %v2305
    %v2352 = vadd.f32 %v2056, %v2323
    %v2353 = vadd.f32 %v2057, %v2309
    %v2354 = vadd.f32 %v2058, %v2324
    %v2355 = vadd.f32 %v2059, %v2313
    %v2356 = vadd.f32 %v2060, %v2325
    %v2357 = vadd.f32 %v2061, %v2317
    %v2358 = vadd.f32 %v2342, 0.0009
    %v2359 = vadd.f32 %v2343, 0.0009
    %v2360 = vadd.f32 %v2344, 0.0009
    %v2361 = vadd.f32 %v2345, 0.0009
    %v2362 = vadd.f32 %v2346, 0.0009
    %v2363 = vadd.f32 %v2347, 0.0009
    %v2364 = vadd.f32 %v2348, 0.0009
    %v2365 = vadd.f32 %v2349, 0.0009
    %v2366 = vadd.f32 %v2350, 0.0009
    %v2367 = vadd.f32 %v2351, 0.0009
    %v2368 = vadd.f32 %v2352, 0.0009
    %v2369 = vadd.f32 %v2353, 0.0009
    %v2370 = vadd.f32 %v2354, 0.0009
    %v2371 = vadd.f32 %v2355, 0.0009
    %v2372 = vadd.f32 %v2356, 0.0009
    %v2373 = vadd.f32 %v2357, 0.0009
    %v2374 = vmul.f32 %v2254, %v2358
    %v2375 = vmul.f32 %v2255, %v2359
    %v2376 = vmul.f32 %v2256, %v2360
    %v2377 = vmul.f32 %v2257, %v2361
    %v2378 = vmul.f32 %v2258, %v2362
    %v2379 = vmul.f32 %v2259, %v2363
    %v2380 = vmul.f32 %v2260, %v2364
    %v2381 = vmul.f32 %v2261, %v2365
    %v2382 = vmul.f32 %v2262, %v2366
    %v2383 = vmul.f32 %v2263, %v2367
    %v2384 = vmul.f32 %v2264, %v2368
    %v2385 = vmul.f32 %v2265, %v2369
    %v2386 = vmul.f32 %v2266, %v2370
    %v2387 = vmul.f32 %v2267, %v2371
    %v2388 = vmul.f32 %v2268, %v2372
    %v2389 = vmul.f32 %v2269, %v2373
    %v2390 = vrcp.pop %v2374
    %v2391 = vmul.f32 %v2374, %v2390
    %v2392 = vsub.f32 1.0, %v2391
    %v2393 = vmul.f32 %v2390, %v2392
    %v2394 = vadd.f32 %v2390, %v2393
    %vm2395 = vweird.f32 %v2374
    %vm2396 = vweird.f32 %v2390
    %vm2397 = vmor %vm2395, %vm2396
    %v2398 = vsel %vm2397, %v2390, %v2394
    %v2399 = vand.u32 2147483647, %v2374
    %vm2400 = vcmp.eq.f32.partialorder %v2399, 8.507059e+37
    %v2401 = vand.u32 %v2374, 2147483648
    %v2402 = vor.u32 1.1754944e-38, %v2401
    %v2403 = vsel %vm2400, %v2402, %v2398
    %v2404 = vmul.f32 %v2150, %v2403
    %v2405 = vrcp.pop %v2375
    %v2406 = vmul.f32 %v2375, %v2405
    %v2407 = vsub.f32 1.0, %v2406
    %v2408 = vmul.f32 %v2405, %v2407
    %v2409 = vadd.f32 %v2405, %v2408
    %vm2410 = vweird.f32 %v2375
    %vm2411 = vweird.f32 %v2405
    %vm2412 = vmor %vm2410, %vm2411
    %v2413 = vsel %vm2412, %v2405, %v2409
    %v2414 = vand.u32 2147483647, %v2375
    %vm2415 = vcmp.eq.f32.partialorder %v2414, 8.507059e+37
    %v2416 = vand.u32 %v2375, 2147483648
    %v2417 = vor.u32 1.1754944e-38, %v2416
    %v2418 = vsel %vm2415, %v2417, %v2413
    %v2419 = vmul.f32 %v2151, %v2418
    %v2420 = vrcp.pop %v2376
    %v2421 = vmul.f32 %v2376, %v2420
    %v2422 = vsub.f32 1.0, %v2421
    %v2423 = vmul.f32 %v2420, %v2422
    %v2424 = vadd.f32 %v2420, %v2423
    %vm2425 = vweird.f32 %v2376
    %vm2426 = vweird.f32 %v2420
    %vm2427 = vmor %vm2425, %vm2426
    %v2428 = vsel %vm2427, %v2420, %v2424
    %v2429 = vand.u32 2147483647, %v2376
    %vm2430 = vcmp.eq.f32.partialorder %v2429, 8.507059e+37
    %v2431 = vand.u32 %v2376, 2147483648
    %v2432 = vor.u32 1.1754944e-38, %v2431
    %v2433 = vsel %vm2430, %v2432, %v2428
    %v2434 = vmul.f32 %v2152, %v2433
    %v2435 = vrcp.pop %v2377
    %v2436 = vmul.f32 %v2377, %v2435
    %v2437 = vsub.f32 1.0, %v2436
    %v2438 = vmul.f32 %v2435, %v2437
    %v2439 = vadd.f32 %v2435, %v2438
    %vm2440 = vweird.f32 %v2377
    %vm2441 = vweird.f32 %v2435
    %vm2442 = vmor %vm2440, %vm2441
    %v2443 = vsel %vm2442, %v2435, %v2439
    %v2444 = vand.u32 2147483647, %v2377
    %vm2445 = vcmp.eq.f32.partialorder %v2444, 8.507059e+37
    %v2446 = vand.u32 %v2377, 2147483648
    %v2447 = vor.u32 1.1754944e-38, %v2446
    %v2448 = vsel %vm2445, %v2447, %v2443
    %v2449 = vmul.f32 %v2153, %v2448
    %v2450 = vrcp.pop %v2378
    %v2451 = vmul.f32 %v2378, %v2450
    %v2452 = vsub.f32 1.0, %v2451
    %v2453 = vmul.f32 %v2450, %v2452
    %v2454 = vadd.f32 %v2450, %v2453
    %vm2455 = vweird.f32 %v2378
    %vm2456 = vweird.f32 %v2450
    %vm2457 = vmor %vm2455, %vm2456
    %v2458 = vsel %vm2457, %v2450, %v2454
    %v2459 = vand.u32 2147483647, %v2378
    %vm2460 = vcmp.eq.f32.partialorder %v2459, 8.507059e+37
    %v2461 = vand.u32 %v2378, 2147483648
    %v2462 = vor.u32 1.1754944e-38, %v2461
    %v2463 = vsel %vm2460, %v2462, %v2458
    %v2464 = vmul.f32 %v2154, %v2463
    %v2465 = vrcp.pop %v2379
    %v2466 = vmul.f32 %v2379, %v2465
    %v2467 = vsub.f32 1.0, %v2466
    %v2468 = vmul.f32 %v2465, %v2467
    %v2469 = vadd.f32 %v2465, %v2468
    %vm2470 = vweird.f32 %v2379
    %vm2471 = vweird.f32 %v2465
    %vm2472 = vmor %vm2470, %vm2471
    %v2473 = vsel %vm2472, %v2465, %v2469
    %v2474 = vand.u32 2147483647, %v2379
    %vm2475 = vcmp.eq.f32.partialorder %v2474, 8.507059e+37
    %v2476 = vand.u32 %v2379, 2147483648
    %v2477 = vor.u32 1.1754944e-38, %v2476
    %v2478 = vsel %vm2475, %v2477, %v2473
    %v2479 = vmul.f32 %v2155, %v2478
    %v2480 = vrcp.pop %v2380
    %v2481 = vmul.f32 %v2380, %v2480
    %v2482 = vsub.f32 1.0, %v2481
    %v2483 = vmul.f32 %v2480, %v2482
    %v2484 = vadd.f32 %v2480, %v2483
    %vm2485 = vweird.f32 %v2380
    %vm2486 = vweird.f32 %v2480
    %vm2487 = vmor %vm2485, %vm2486
    %v2488 = vsel %vm2487, %v2480, %v2484
    %v2489 = vand.u32 2147483647, %v2380
    %vm2490 = vcmp.eq.f32.partialorder %v2489, 8.507059e+37
    %v2491 = vand.u32 %v2380, 2147483648
    %v2492 = vor.u32 1.1754944e-38, %v2491
    %v2493 = vsel %vm2490, %v2492, %v2488
    %v2494 = vmul.f32 %v2156, %v2493
    %v2495 = vrcp.pop %v2381
    %v2496 = vmul.f32 %v2381, %v2495
    %v2497 = vsub.f32 1.0, %v2496
    %v2498 = vmul.f32 %v2495, %v2497
    %v2499 = vadd.f32 %v2495, %v2498
    %vm2500 = vweird.f32 %v2381
    %vm2501 = vweird.f32 %v2495
    %vm2502 = vmor %vm2500, %vm2501
    %v2503 = vsel %vm2502, %v2495, %v2499
    %v2504 = vand.u32 2147483647, %v2381
    %vm2505 = vcmp.eq.f32.partialorder %v2504, 8.507059e+37
    %v2506 = vand.u32 %v2381, 2147483648
    %v2507 = vor.u32 1.1754944e-38, %v2506
    %v2508 = vsel %vm2505, %v2507, %v2503
    %v2509 = vmul.f32 %v2157, %v2508
    %v2510 = vrcp.pop %v2382
    %v2511 = vmul.f32 %v2382, %v2510
    %v2512 = vsub.f32 1.0, %v2511
    %v2513 = vmul.f32 %v2510, %v2512
    %v2514 = vadd.f32 %v2510, %v2513
    %vm2515 = vweird.f32 %v2382
    %vm2516 = vweird.f32 %v2510
    %vm2517 = vmor %vm2515, %vm2516
    %v2518 = vsel %vm2517, %v2510, %v2514
    %v2519 = vand.u32 2147483647, %v2382
    %vm2520 = vcmp.eq.f32.partialorder %v2519, 8.507059e+37
    %v2521 = vand.u32 %v2382, 2147483648
    %v2522 = vor.u32 1.1754944e-38, %v2521
    %v2523 = vsel %vm2520, %v2522, %v2518
    %v2524 = vmul.f32 %v2158, %v2523
    %v2525 = vrcp.pop %v2383
    %v2526 = vmul.f32 %v2383, %v2525
    %v2527 = vsub.f32 1.0, %v2526
    %v2528 = vmul.f32 %v2525, %v2527
    %v2529 = vadd.f32 %v2525, %v2528
    %vm2530 = vweird.f32 %v2383
    %vm2531 = vweird.f32 %v2525
    %vm2532 = vmor %vm2530, %vm2531
    %v2533 = vsel %vm2532, %v2525, %v2529
    %v2534 = vand.u32 2147483647, %v2383
    %vm2535 = vcmp.eq.f32.partialorder %v2534, 8.507059e+37
    %v2536 = vand.u32 %v2383, 2147483648
    %v2537 = vor.u32 1.1754944e-38, %v2536
    %v2538 = vsel %vm2535, %v2537, %v2533
    %v2539 = vmul.f32 %v2159, %v2538
    %v2540 = vrcp.pop %v2384
    %v2541 = vmul.f32 %v2384, %v2540
    %v2542 = vsub.f32 1.0, %v2541
    %v2543 = vmul.f32 %v2540, %v2542
    %v2544 = vadd.f32 %v2540, %v2543
    %vm2545 = vweird.f32 %v2384
    %vm2546 = vweird.f32 %v2540
    %vm2547 = vmor %vm2545, %vm2546
    %v2548 = vsel %vm2547, %v2540, %v2544
    %v2549 = vand.u32 2147483647, %v2384
    %vm2550 = vcmp.eq.f32.partialorder %v2549, 8.507059e+37
    %v2551 = vand.u32 %v2384, 2147483648
    %v2552 = vor.u32 1.1754944e-38, %v2551
    %v2553 = vsel %vm2550, %v2552, %v2548
    %v2554 = vmul.f32 %v2160, %v2553
    %v2555 = vrcp.pop %v2385
    %v2556 = vmul.f32 %v2385, %v2555
    %v2557 = vsub.f32 1.0, %v2556
    %v2558 = vmul.f32 %v2555, %v2557
    %v2559 = vadd.f32 %v2555, %v2558
    %vm2560 = vweird.f32 %v2385
    %vm2561 = vweird.f32 %v2555
    %vm2562 = vmor %vm2560, %vm2561
    %v2563 = vsel %vm2562, %v2555, %v2559
    %v2564 = vand.u32 2147483647, %v2385
    %vm2565 = vcmp.eq.f32.partialorder %v2564, 8.507059e+37
    %v2566 = vand.u32 %v2385, 2147483648
    %v2567 = vor.u32 1.1754944e-38, %v2566
    %v2568 = vsel %vm2565, %v2567, %v2563
    %v2569 = vmul.f32 %v2161, %v2568
    %v2570 = vrcp.pop %v2386
    %v2571 = vmul.f32 %v2386, %v2570
    %v2572 = vsub.f32 1.0, %v2571
    %v2573 = vmul.f32 %v2570, %v2572
    %v2574 = vadd.f32 %v2570, %v2573
    %vm2575 = vweird.f32 %v2386
    %vm2576 = vweird.f32 %v2570
    %vm2577 = vmor %vm2575, %vm2576
    %v2578 = vsel %vm2577, %v2570, %v2574
    %v2579 = vand.u32 2147483647, %v2386
    %vm2580 = vcmp.eq.f32.partialorder %v2579, 8.507059e+37
    %v2581 = vand.u32 %v2386, 2147483648
    %v2582 = vor.u32 1.1754944e-38, %v2581
    %v2583 = vsel %vm2580, %v2582, %v2578
    %v2584 = vmul.f32 %v2162, %v2583
    %v2585 = vrcp.pop %v2387
    %v2586 = vmul.f32 %v2387, %v2585
    %v2587 = vsub.f32 1.0, %v2586
    %v2588 = vmul.f32 %v2585, %v2587
    %v2589 = vadd.f32 %v2585, %v2588
    %vm2590 = vweird.f32 %v2387
    %vm2591 = vweird.f32 %v2585
    %vm2592 = vmor %vm2590, %vm2591
    %v2593 = vsel %vm2592, %v2585, %v2589
    %v2594 = vand.u32 2147483647, %v2387
    %vm2595 = vcmp.eq.f32.partialorder %v2594, 8.507059e+37
    %v2596 = vand.u32 %v2387, 2147483648
    %v2597 = vor.u32 1.1754944e-38, %v2596
    %v2598 = vsel %vm2595, %v2597, %v2593
    %v2599 = vmul.f32 %v2163, %v2598
    %v2600 = vrcp.pop %v2388
    %v2601 = vmul.f32 %v2388, %v2600
    %v2602 = vsub.f32 1.0, %v2601
    %v2603 = vmul.f32 %v2600, %v2602
    %v2604 = vadd.f32 %v2600, %v2603
    %vm2605 = vweird.f32 %v2388
    %vm2606 = vweird.f32 %v2600
    %vm2607 = vmor %vm2605, %vm2606
    %v2608 = vsel %vm2607, %v2600, %v2604
    %v2609 = vand.u32 2147483647, %v2388
    %vm2610 = vcmp.eq.f32.partialorder %v2609, 8.507059e+37
    %v2611 = vand.u32 %v2388, 2147483648
    %v2612 = vor.u32 1.1754944e-38, %v2611
    %v2613 = vsel %vm2610, %v2612, %v2608
    %v2614 = vmul.f32 %v2164, %v2613
    %v2615 = vrcp.pop %v2389
    %v2616 = vmul.f32 %v2389, %v2615
    %v2617 = vsub.f32 1.0, %v2616
    %v2618 = vmul.f32 %v2615, %v2617
    %v2619 = vadd.f32 %v2615, %v2618
    %vm2620 = vweird.f32 %v2389
    %vm2621 = vweird.f32 %v2615
    %vm2622 = vmor %vm2620, %vm2621
    %v2623 = vsel %vm2622, %v2615, %v2619
    %v2624 = vand.u32 2147483647, %v2389
    %vm2625 = vcmp.eq.f32.partialorder %v2624, 8.507059e+37
    %v2626 = vand.u32 %v2389, 2147483648
    %v2627 = vor.u32 1.1754944e-38, %v2626
    %v2628 = vsel %vm2625, %v2627, %v2623
    %v2629 = vmul.f32 %v2165, %v2628
    %v2630 = vsel %vm222, %v2419, 0.0
    %v2631 = vadd.f32 %v2404, %v2630
    %v2632 = vadd.f32 %v2631, %v2434
    %v2633 = vsel %vm222, %v2449, 0.0
    %v2634 = vadd.f32 %v2632, %v2633
    %v2635 = vadd.f32 %v2634, %v2464
    %v2636 = vsel %vm222, %v2479, 0.0
    %v2637 = vadd.f32 %v2635, %v2636
    %v2638 = vadd.f32 %v2637, %v2494
    %v2639 = vsel %vm222, %v2509, 0.0
    %v2640 = vadd.f32 %v2638, %v2639
    %v2641 = vadd.f32 %v2640, %v2524
    %v2642 = vsel %vm222, %v2539, 0.0
    %v2643 = vadd.f32 %v2641, %v2642
    %v2644 = vadd.f32 %v2643, %v2554
    %v2645 = vsel %vm222, %v2569, 0.0
    %v2646 = vadd.f32 %v2644, %v2645
    %v2647 = vadd.f32 %v2646, %v2584
    %v2648 = vsel %vm222, %v2599, 0.0
    %v2649 = vadd.f32 %v2647, %v2648
    %v2650 = vadd.f32 %v2649, %v2614
    %v2651 = vsel %vm222, %v2629, 0.0
    %v2652 = vadd.f32 %v2650, %v2651
    %2653 = vadd.xlane.f32.xlu0 %v2652
    %v2654 = vpop.xlane.xlu0 %2653
    %v2655 = vrot.slane %v2654, 4
    %v2656 = vadd.f32 %v2654, %v2655
    %v2657 = vrot.slane %v2656, 2
    %v2658 = vadd.f32 %v2656, %v2657
    %v2659 = vrot.slane %v2658, 1
    %v2660 = vadd.f32 %v2658, %v2659
    %s2661 = vtos %v2660
    %s2662 = scalar_lea.smem [#allocation18], 0
    %2663 = sst [smem:[%s2662]] %s2661
    // Predicated region
    $region58: #{tpu_custom_call.1} parent=1 // pred_check
      _
    $region59: #{tpu_custom_call.1} parent=1 // pred_check_branch
      %2665 = sbr.rel (0) target = $region61
    $region60: #{tpu_custom_call.1} parent=1 // pred_region
      %2667 = vsyncadd [#allocation4], 0
      %s2668 = sshll.u32 [#allocation16], 4
      %s2669 = int_to_ptr.vmem [resolvable:$true] %s2668
      %s2670 = sshll.u32 %s7, 4
      %s2671 = int_to_ptr.hbm [resolvable:$true] %s2670
      %2676 = dma.vmem_to_hbm [thread:$0]  %s2669, 3072, %s2671, [#allocation4], 128, 128, 8
    $region61: #{tpu_custom_call.1} parent=1 // pred_fallthru
      _
    // Predicated region
    $region62: #{tpu_custom_call.1} parent=1 // pred_check
      _
    $region63: #{tpu_custom_call.1} parent=1 // pred_check_branch
      %2678 = sbr.rel (0) target = $region65
    $region64: #{tpu_custom_call.1} parent=1 // pred_region
      %2680 = vsyncadd [#allocation6], 0
      %s2682 = sshll.u32 %s8, 4
      %s2683 = int_to_ptr.hbm [resolvable:$true] %s2682
      %2685 = dma.smem_to_hbm [#allocation17], 16, %s2683, [#allocation6]
    $region65: #{tpu_custom_call.1} parent=1 // pred_fallthru
      _
    // Predicated region
    $region66: #{tpu_custom_call.1} parent=1 // pred_check
      _
    $region67: #{tpu_custom_call.1} parent=1 // pred_check_branch
      %2687 = sbr.rel (0) target = $region69
    $region68: #{tpu_custom_call.1} parent=1 // pred_region
      %2689 = vsyncadd [#allocation19], 0
      %s2691 = sshll.u32 %s9, 4
      %s2692 = int_to_ptr.hbm [resolvable:$true] %s2691
      %2694 = dma.smem_to_hbm [#allocation18], 16, %s2692, [#allocation19]
    $region69: #{tpu_custom_call.1} parent=1 // pred_fallthru
      _
    // Predicated region
    $region70: #{tpu_custom_call.1} parent=1 // pred_check
      _
    $region71: #{tpu_custom_call.1} parent=1 // pred_check_branch
      %2696 = sbr.rel (0) target = $region73
    $region72: #{tpu_custom_call.1} parent=1 // pred_region
      %2698 = vsyncadd [#allocation19], 0
      %s2700 = sshll.u32 %s10, 4
      %s2701 = int_to_ptr.hbm [resolvable:$true] %s2700
      %2703 = dma.smem_to_hbm [#allocation20], 16, %s2701, [#allocation19]
    $region73: #{tpu_custom_call.1} parent=1 // pred_fallthru
      _
    // Predicated region
    $region74: #{tpu_custom_call.1} parent=1 // pred_check
      _
    $region75: #{tpu_custom_call.1} parent=1 // pred_check_branch
      %2705 = sbr.rel (0) target = $region77
    $region76: #{tpu_custom_call.1} parent=1 // pred_region
      %2707 = dma.done [#allocation4], 3072
    $region77: #{tpu_custom_call.1} parent=1 // pred_fallthru
      _
    // Predicated region
    $region78: #{tpu_custom_call.1} parent=1 // pred_check
      _
    $region79: #{tpu_custom_call.1} parent=1 // pred_check_branch
      %2709 = sbr.rel (0) target = $region81
    $region80: #{tpu_custom_call.1} parent=1 // pred_region
      %2711 = dma.done [#allocation6], 16
    $region81: #{tpu_custom_call.1} parent=1 // pred_fallthru
      _
    // Predicated region
    $region82: #{tpu_custom_call.1} parent=1 // pred_check
      _
    $region83: #{tpu_custom_call.1} parent=1 // pred_check_branch
      %2713 = sbr.rel (0) target = $region85
    $region84: #{tpu_custom_call.1} parent=1 // pred_region
      %2715 = dma.done [#allocation19], 16
    $region85: #{tpu_custom_call.1} parent=1 // pred_fallthru
      _
    // Predicated region
    $region86: #{tpu_custom_call.1} parent=1 // pred_check
      _
    $region87: #{tpu_custom_call.1} parent=1 // pred_check_branch
      %2717 = sbr.rel (0) target = $region89
    $region88: #{tpu_custom_call.1} parent=1 // pred_region
      %2719 = dma.done [#allocation19], 16
    $region89: #{tpu_custom_call.1} parent=1 // pred_fallthru
      _
    %2720 = sfence
    %2721 = vsyncpa [#allocation3], 1
    %2722 = vsyncpa [#allocation9], 1
    %2723 = vsyncpa [#allocation12], 1
    %2724 = vsyncpa [#allocation15], 1
    %2725 = vsyncpa [#allocation4], 1
    %2726 = vsyncpa [#allocation5], 1
    %2727 = vsyncpa [#allocation6], 1
    %2728 = vsyncpa [#allocation19], 1

</llo_original>
